<compile_context>
chip_gen: v7x
topology: tpu7x:2x2x1
jax: 0.10.0
libtpu: 0.0.40
codegen_flags: <defaults>
</compile_context>

<pallas_src>
import jax
import jax.numpy as jnp
import numpy as np
from jax.experimental import pallas as pl
from jax.experimental.pallas import tpu as pltpu


def torch_model_kernel(ids_ref, emb_ref,
                       w_ih1_ref, w_hh1_ref, b1_ref,
                       w2_ref, b2_ref,
                       w_cls_ref, b_cls_ref,
                       out_ref, h2_scratch):
    B, L = ids_ref.shape
    V, D = emb_ref.shape
    H = w_hh1_ref.shape[0]

    # ---- embedding + AvgPool fused: normalized token-count matrix @ embedding table ----
    # counts[b, v] = sum_l [ids[b, l] == v];  pooled = (counts @ emb) / L
    vocab_iota = jax.lax.broadcasted_iota(jnp.int32, (B, V), 1)
    counts = (ids_ref[:, 0:1] == vocab_iota).astype(jnp.float32)
    for l in range(1, L):
        counts = counts + (ids_ref[:, l:l + 1] == vocab_iota).astype(jnp.float32)
    pooled = jnp.dot(counts, emb_ref[...],
                     preferred_element_type=jnp.float32) * (1.0 / L)          # (B, D)

    # ---- layer-1 input projection hoisted out of the recurrence ----
    x1 = jnp.dot(pooled, w_ih1_ref[...],
                 preferred_element_type=jnp.float32) + b1_ref[...]            # (B, H)

    w_hh1 = w_hh1_ref[...]
    w2 = w2_ref[...]            # (2H, H) = [W_ih2 ; W_hh2]
    b2 = b2_ref[...]

    # ---- 2-layer tanh RNN; recurrence over the batch axis (torch unbatched semantics) ----
    h1 = jnp.zeros((1, H), jnp.float32)
    h2 = jnp.zeros((1, H), jnp.float32)
    for t in range(B):   # B is small and static; unrolled sequential recurrence
        h1 = jnp.tanh(x1[t:t + 1, :]
                      + jnp.dot(h1, w_hh1, preferred_element_type=jnp.float32))
        h12 = jnp.concatenate([h1, h2], axis=1)                               # (1, 2H)
        h2 = jnp.tanh(jnp.dot(h12, w2, preferred_element_type=jnp.float32) + b2)
        h2_scratch[t:t + 1, :] = h2

    # ---- batched classifier + sigmoid + single store ----
    logits = jnp.dot(h2_scratch[...], w_cls_ref[...],
                     preferred_element_type=jnp.float32) + b_cls_ref[...]     # (B, 1)
    out_ref[...] = jax.nn.sigmoid(logits)


def torch_model_forward(x, params):
    """x: (B, L) int32 token ids.  Returns y_pred of shape (B, 1) float32."""
    B, L = x.shape
    (emb, w_ih1, w_hh1, b_ih1, b_hh1,
     w_ih2, w_hh2, b_ih2, b_hh2, w_cls, b_cls) = params
    H = w_hh1.shape[0]

    # TODO(synk): like the one-hot trick, out-of-range token ids silently map to a zero
    # embedding row instead of raising as nn.Embedding would.
    args = (
        x.astype(jnp.int32),                                  # (B, L) lane-dense ids
        emb,                                                  # (V, D)
        w_ih1.T,                                              # (D, H)
        w_hh1.T,                                              # (H, H)
        (b_ih1 + b_hh1).reshape(1, H),                        # (1, H)
        jnp.concatenate([w_ih2.T, w_hh2.T], axis=0),          # (2H, H) fused layer-2 weight
        (b_ih2 + b_hh2).reshape(1, H),                        # (1, H)
        w_cls.T,                                              # (H, 1)
        b_cls.reshape(1, 1),                                  # (1, 1)
    )
    return pl.pallas_call(
        torch_model_kernel,
        out_shape=jax.ShapeDtypeStruct((B, 1), jnp.float32),
        in_specs=[pl.BlockSpec(memory_space=pltpu.MemorySpace.VMEM)] * len(args),
        out_specs=pl.BlockSpec(memory_space=pltpu.MemorySpace.VMEM),
        scratch_shapes=[pltpu.VMEM((B, H), jnp.float32)],
    )(*args)


if __name__ == "__main__":
    V, D, H, L, B = 30, 32, 32, 8, 8   # vocab, vector_dim, hidden_dim, sentence_length, batch
    key = jax.random.PRNGKey(0)
    ks = jax.random.split(key, 12)
    s = 1.0 / np.sqrt(H)

    emb   = jax.random.normal(ks[0], (V, D), jnp.float32)                 # nn.Embedding
    w_ih1 = jax.random.uniform(ks[1], (H, D), jnp.float32, -s, s)         # rnn.weight_ih_l0
    w_hh1 = jax.random.uniform(ks[2], (H, H), jnp.float32, -s, s)         # rnn.weight_hh_l0
    b_ih1 = jax.random.uniform(ks[3], (H,),   jnp.float32, -s, s)
    b_hh1 = jax.random.uniform(ks[4], (H,),   jnp.float32, -s, s)
    w_ih2 = jax.random.uniform(ks[5], (H, H), jnp.float32, -s, s)         # rnn.weight_ih_l1
    w_hh2 = jax.random.uniform(ks[6], (H, H), jnp.float32, -s, s)
    b_ih2 = jax.random.uniform(ks[7], (H,),   jnp.float32, -s, s)
    b_hh2 = jax.random.uniform(ks[8], (H,),   jnp.float32, -s, s)
    w_cls = jax.random.uniform(ks[9], (1, H), jnp.float32, -s, s)         # classify.weight
    b_cls = jax.random.uniform(ks[10], (1,),  jnp.float32, -s, s)         # classify.bias
    x = jax.random.randint(ks[11], (B, L), 0, V, jnp.int32)

    params = (emb, w_ih1, w_hh1, b_ih1, b_hh1,
              w_ih2, w_hh2, b_ih2, b_hh2, w_cls, b_cls)

    y = jax.block_until_ready(torch_model_forward(x, params))

    # plain-JAX reference mirroring the PyTorch forward
    def ref(x):
        e = emb[x]                     # (B, L, D)
        pooled = e.mean(axis=1)        # transpose(1,2) + AvgPool1d(L) + squeeze -> (B, D)

        def layer(inp, w_ih, w_hh, b_ih, b_hh):
            h = jnp.zeros((H,), jnp.float32)
            outs = []
            for t in range(inp.shape[0]):
                h = jnp.tanh(inp[t] @ w_ih.T + b_ih + h @ w_hh.T + b_hh)
                outs.append(h)
            return jnp.stack(outs)

        o1 = layer(pooled, w_ih1, w_hh1, b_ih1, b_hh1)
        o2 = layer(o1, w_ih2, w_hh2, b_ih2, b_hh2)
        return jax.nn.sigmoid(o2 @ w_cls.T + b_cls)

    y_ref = ref(x)
    np.testing.assert_allclose(np.asarray(y), np.asarray(y_ref), atol=2e-3, rtol=2e-3)
    print("KERNEL_OK")
</pallas_src>

<mosaic_0001>
module attributes {stable_mosaic.version = 11 : i64} {
  func.func @torch_model_kernel(%arg0: memref<8x8xi32, #tpu.memory_space<vmem>>, %arg1: memref<30x32xf32, #tpu.memory_space<vmem>>, %arg2: memref<32x32xf32, #tpu.memory_space<vmem>>, %arg3: memref<32x32xf32, #tpu.memory_space<vmem>>, %arg4: memref<1x32xf32, #tpu.memory_space<vmem>>, %arg5: memref<64x32xf32, #tpu.memory_space<vmem>>, %arg6: memref<1x32xf32, #tpu.memory_space<vmem>>, %arg7: memref<32x1xf32, #tpu.memory_space<vmem>>, %arg8: memref<1x1xf32, #tpu.memory_space<vmem>>, %arg9: memref<8x1xf32, #tpu.memory_space<vmem>>, %arg10: memref<8x32xf32, #tpu.memory_space<vmem>>) attributes {dimension_semantics = [], scalar_prefetch = 0 : i64, scratch_operands = 1 : i64, tpu.core_type = #tpu.core_type<tc>} {
    %0 = tpu.iota {dimensions = array<i32: 1>} : vector<8x30xi32>
    %c0 = arith.constant 0 : index
    %c0_0 = arith.constant 0 : index
    %1 = vector.load %arg0[%c0, %c0_0] : memref<8x8xi32, #tpu.memory_space<vmem>>, vector<8x1xi32>
    %2 = vector.broadcast %1 : vector<8x1xi32> to vector<8x30xi32>
    %3 = arith.cmpi eq, %2, %0 : vector<8x30xi32>
    %4 = arith.extui %3 : vector<8x30xi1> to vector<8x30xi32>
    %5 = arith.sitofp %4 : vector<8x30xi32> to vector<8x30xf32>
    %c0_1 = arith.constant 0 : index
    %c1 = arith.constant 1 : index
    %6 = vector.load %arg0[%c0_1, %c1] : memref<8x8xi32, #tpu.memory_space<vmem>>, vector<8x1xi32>
    %7 = vector.broadcast %6 : vector<8x1xi32> to vector<8x30xi32>
    %8 = arith.cmpi eq, %7, %0 : vector<8x30xi32>
    %9 = arith.extui %8 : vector<8x30xi1> to vector<8x30xi32>
    %10 = arith.sitofp %9 : vector<8x30xi32> to vector<8x30xf32>
    %11 = arith.addf %5, %10 : vector<8x30xf32>
    %c0_2 = arith.constant 0 : index
    %c2 = arith.constant 2 : index
    %12 = vector.load %arg0[%c0_2, %c2] : memref<8x8xi32, #tpu.memory_space<vmem>>, vector<8x1xi32>
    %13 = vector.broadcast %12 : vector<8x1xi32> to vector<8x30xi32>
    %14 = arith.cmpi eq, %13, %0 : vector<8x30xi32>
    %15 = arith.extui %14 : vector<8x30xi1> to vector<8x30xi32>
    %16 = arith.sitofp %15 : vector<8x30xi32> to vector<8x30xf32>
    %17 = arith.addf %11, %16 : vector<8x30xf32>
    %c0_3 = arith.constant 0 : index
    %c3 = arith.constant 3 : index
    %18 = vector.load %arg0[%c0_3, %c3] : memref<8x8xi32, #tpu.memory_space<vmem>>, vector<8x1xi32>
    %19 = vector.broadcast %18 : vector<8x1xi32> to vector<8x30xi32>
    %20 = arith.cmpi eq, %19, %0 : vector<8x30xi32>
    %21 = arith.extui %20 : vector<8x30xi1> to vector<8x30xi32>
    %22 = arith.sitofp %21 : vector<8x30xi32> to vector<8x30xf32>
    %23 = arith.addf %17, %22 : vector<8x30xf32>
    %c0_4 = arith.constant 0 : index
    %c4 = arith.constant 4 : index
    %24 = vector.load %arg0[%c0_4, %c4] : memref<8x8xi32, #tpu.memory_space<vmem>>, vector<8x1xi32>
    %25 = vector.broadcast %24 : vector<8x1xi32> to vector<8x30xi32>
    %26 = arith.cmpi eq, %25, %0 : vector<8x30xi32>
    %27 = arith.extui %26 : vector<8x30xi1> to vector<8x30xi32>
    %28 = arith.sitofp %27 : vector<8x30xi32> to vector<8x30xf32>
    %29 = arith.addf %23, %28 : vector<8x30xf32>
    %c0_5 = arith.constant 0 : index
    %c5 = arith.constant 5 : index
    %30 = vector.load %arg0[%c0_5, %c5] : memref<8x8xi32, #tpu.memory_space<vmem>>, vector<8x1xi32>
    %31 = vector.broadcast %30 : vector<8x1xi32> to vector<8x30xi32>
    %32 = arith.cmpi eq, %31, %0 : vector<8x30xi32>
    %33 = arith.extui %32 : vector<8x30xi1> to vector<8x30xi32>
    %34 = arith.sitofp %33 : vector<8x30xi32> to vector<8x30xf32>
    %35 = arith.addf %29, %34 : vector<8x30xf32>
    %c0_6 = arith.constant 0 : index
    %c6 = arith.constant 6 : index
    %36 = vector.load %arg0[%c0_6, %c6] : memref<8x8xi32, #tpu.memory_space<vmem>>, vector<8x1xi32>
    %37 = vector.broadcast %36 : vector<8x1xi32> to vector<8x30xi32>
    %38 = arith.cmpi eq, %37, %0 : vector<8x30xi32>
    %39 = arith.extui %38 : vector<8x30xi1> to vector<8x30xi32>
    %40 = arith.sitofp %39 : vector<8x30xi32> to vector<8x30xf32>
    %41 = arith.addf %35, %40 : vector<8x30xf32>
    %c0_7 = arith.constant 0 : index
    %c7 = arith.constant 7 : index
    %42 = vector.load %arg0[%c0_7, %c7] : memref<8x8xi32, #tpu.memory_space<vmem>>, vector<8x1xi32>
    %43 = vector.broadcast %42 : vector<8x1xi32> to vector<8x30xi32>
    %44 = arith.cmpi eq, %43, %0 : vector<8x30xi32>
    %45 = arith.extui %44 : vector<8x30xi1> to vector<8x30xi32>
    %46 = arith.sitofp %45 : vector<8x30xi32> to vector<8x30xf32>
    %47 = arith.addf %41, %46 : vector<8x30xf32>
    %c0_8 = arith.constant 0 : index
    %c0_9 = arith.constant 0 : index
    %48 = vector.load %arg1[%c0_8, %c0_9] : memref<30x32xf32, #tpu.memory_space<vmem>>, vector<30x32xf32>
    %cst = arith.constant dense<0.000000e+00> : vector<8x32xf32>
    %49 = tpu.matmul %47, %48, %cst {dimension_numbers = #tpu.dot_dimension_numbers<[1], [0], [0], [1], [0, 0, 1, 1], [], []>} : vector<8x30xf32>, vector<30x32xf32>, vector<8x32xf32> -> vector<8x32xf32>
    %cst_10 = arith.constant 1.250000e-01 : f32
    %50 = vector.broadcast %cst_10 : f32 to vector<8x32xf32>
    %51 = arith.mulf %49, %50 : vector<8x32xf32>
    %c0_11 = arith.constant 0 : index
    %c0_12 = arith.constant 0 : index
    %52 = vector.load %arg2[%c0_11, %c0_12] : memref<32x32xf32, #tpu.memory_space<vmem>>, vector<32x32xf32>
    %cst_13 = arith.constant dense<0.000000e+00> : vector<8x32xf32>
    %53 = tpu.matmul %51, %52, %cst_13 {dimension_numbers = #tpu.dot_dimension_numbers<[1], [0], [0], [1], [0, 0, 1, 1], [], []>} : vector<8x32xf32>, vector<32x32xf32>, vector<8x32xf32> -> vector<8x32xf32>
    %c0_14 = arith.constant 0 : index
    %c0_15 = arith.constant 0 : index
    %54 = vector.load %arg4[%c0_14, %c0_15] : memref<1x32xf32, #tpu.memory_space<vmem>>, vector<1x32xf32>
    %55 = vector.broadcast %54 : vector<1x32xf32> to vector<8x32xf32>
    %56 = arith.addf %53, %55 : vector<8x32xf32>
    %c0_16 = arith.constant 0 : index
    %c0_17 = arith.constant 0 : index
    %57 = vector.load %arg3[%c0_16, %c0_17] : memref<32x32xf32, #tpu.memory_space<vmem>>, vector<32x32xf32>
    %c0_18 = arith.constant 0 : index
    %c0_19 = arith.constant 0 : index
    %58 = vector.load %arg5[%c0_18, %c0_19] : memref<64x32xf32, #tpu.memory_space<vmem>>, vector<64x32xf32>
    %c0_20 = arith.constant 0 : index
    %c0_21 = arith.constant 0 : index
    %59 = vector.load %arg6[%c0_20, %c0_21] : memref<1x32xf32, #tpu.memory_space<vmem>>, vector<1x32xf32>
    %cst_22 = arith.constant 0.000000e+00 : f32
    %60 = vector.broadcast %cst_22 : f32 to vector<1x32xf32>
    %cst_23 = arith.constant 0.000000e+00 : f32
    %61 = vector.broadcast %cst_23 : f32 to vector<1x32xf32>
    %62 = vector.extract_strided_slice %56 {offsets = [0, 0], sizes = [1, 32], strides = [1, 1]} : vector<8x32xf32> to vector<1x32xf32>
    %cst_24 = arith.constant dense<0.000000e+00> : vector<1x32xf32>
    %63 = tpu.matmul %60, %57, %cst_24 {dimension_numbers = #tpu.dot_dimension_numbers<[1], [0], [0], [1], [0, 0, 1, 1], [], []>} : vector<1x32xf32>, vector<32x32xf32>, vector<1x32xf32> -> vector<1x32xf32>
    %64 = arith.addf %62, %63 : vector<1x32xf32>
    %65 = math.tanh %64 : vector<1x32xf32>
    %66 = tpu.concatenate %65, %61 in 1 : vector<1x32xf32>, vector<1x32xf32> -> vector<1x64xf32>
    %cst_25 = arith.constant dense<0.000000e+00> : vector<1x32xf32>
    %67 = tpu.matmul %66, %58, %cst_25 {dimension_numbers = #tpu.dot_dimension_numbers<[1], [0], [0], [1], [0, 0, 1, 1], [], []>} : vector<1x64xf32>, vector<64x32xf32>, vector<1x32xf32> -> vector<1x32xf32>
    %68 = arith.addf %67, %59 : vector<1x32xf32>
    %69 = math.tanh %68 : vector<1x32xf32>
    %c0_26 = arith.constant 0 : index
    %c0_27 = arith.constant 0 : index
    %70 = vector.load %arg10[%c0_26, %c0_27] : memref<8x32xf32, #tpu.memory_space<vmem>>, vector<1x32xf32>
    tpu.vector_store %arg10[%c0_26, %c0_27], %69 {strides = array<i32>} : memref<8x32xf32, #tpu.memory_space<vmem>>, vector<1x32xf32>,
    %71 = vector.extract_strided_slice %56 {offsets = [1, 0], sizes = [1, 32], strides = [1, 1]} : vector<8x32xf32> to vector<1x32xf32>
    %cst_28 = arith.constant dense<0.000000e+00> : vector<1x32xf32>
    %72 = tpu.matmul %65, %57, %cst_28 {dimension_numbers = #tpu.dot_dimension_numbers<[1], [0], [0], [1], [0, 0, 1, 1], [], []>} : vector<1x32xf32>, vector<32x32xf32>, vector<1x32xf32> -> vector<1x32xf32>
    %73 = arith.addf %71, %72 : vector<1x32xf32>
    %74 = math.tanh %73 : vector<1x32xf32>
    %75 = tpu.concatenate %74, %69 in 1 : vector<1x32xf32>, vector<1x32xf32> -> vector<1x64xf32>
    %cst_29 = arith.constant dense<0.000000e+00> : vector<1x32xf32>
    %76 = tpu.matmul %75, %58, %cst_29 {dimension_numbers = #tpu.dot_dimension_numbers<[1], [0], [0], [1], [0, 0, 1, 1], [], []>} : vector<1x64xf32>, vector<64x32xf32>, vector<1x32xf32> -> vector<1x32xf32>
    %77 = arith.addf %76, %59 : vector<1x32xf32>
    %78 = math.tanh %77 : vector<1x32xf32>
    %c1_30 = arith.constant 1 : index
    %c0_31 = arith.constant 0 : index
    %79 = vector.load %arg10[%c1_30, %c0_31] : memref<8x32xf32, #tpu.memory_space<vmem>>, vector<1x32xf32>
    tpu.vector_store %arg10[%c1_30, %c0_31], %78 {strides = array<i32>} : memref<8x32xf32, #tpu.memory_space<vmem>>, vector<1x32xf32>,
    %80 = vector.extract_strided_slice %56 {offsets = [2, 0], sizes = [1, 32], strides = [1, 1]} : vector<8x32xf32> to vector<1x32xf32>
    %cst_32 = arith.constant dense<0.000000e+00> : vector<1x32xf32>
    %81 = tpu.matmul %74, %57, %cst_32 {dimension_numbers = #tpu.dot_dimension_numbers<[1], [0], [0], [1], [0, 0, 1, 1], [], []>} : vector<1x32xf32>, vector<32x32xf32>, vector<1x32xf32> -> vector<1x32xf32>
    %82 = arith.addf %80, %81 : vector<1x32xf32>
    %83 = math.tanh %82 : vector<1x32xf32>
    %84 = tpu.concatenate %83, %78 in 1 : vector<1x32xf32>, vector<1x32xf32> -> vector<1x64xf32>
    %cst_33 = arith.constant dense<0.000000e+00> : vector<1x32xf32>
    %85 = tpu.matmul %84, %58, %cst_33 {dimension_numbers = #tpu.dot_dimension_numbers<[1], [0], [0], [1], [0, 0, 1, 1], [], []>} : vector<1x64xf32>, vector<64x32xf32>, vector<1x32xf32> -> vector<1x32xf32>
    %86 = arith.addf %85, %59 : vector<1x32xf32>
    %87 = math.tanh %86 : vector<1x32xf32>
    %c2_34 = arith.constant 2 : index
    %c0_35 = arith.constant 0 : index
    %88 = vector.load %arg10[%c2_34, %c0_35] : memref<8x32xf32, #tpu.memory_space<vmem>>, vector<1x32xf32>
    tpu.vector_store %arg10[%c2_34, %c0_35], %87 {strides = array<i32>} : memref<8x32xf32, #tpu.memory_space<vmem>>, vector<1x32xf32>,
    %89 = vector.extract_strided_slice %56 {offsets = [3, 0], sizes = [1, 32], strides = [1, 1]} : vector<8x32xf32> to vector<1x32xf32>
    %cst_36 = arith.constant dense<0.000000e+00> : vector<1x32xf32>
    %90 = tpu.matmul %83, %57, %cst_36 {dimension_numbers = #tpu.dot_dimension_numbers<[1], [0], [0], [1], [0, 0, 1, 1], [], []>} : vector<1x32xf32>, vector<32x32xf32>, vector<1x32xf32> -> vector<1x32xf32>
    %91 = arith.addf %89, %90 : vector<1x32xf32>
    %92 = math.tanh %91 : vector<1x32xf32>
    %93 = tpu.concatenate %92, %87 in 1 : vector<1x32xf32>, vector<1x32xf32> -> vector<1x64xf32>
    %cst_37 = arith.constant dense<0.000000e+00> : vector<1x32xf32>
    %94 = tpu.matmul %93, %58, %cst_37 {dimension_numbers = #tpu.dot_dimension_numbers<[1], [0], [0], [1], [0, 0, 1, 1], [], []>} : vector<1x64xf32>, vector<64x32xf32>, vector<1x32xf32> -> vector<1x32xf32>
    %95 = arith.addf %94, %59 : vector<1x32xf32>
    %96 = math.tanh %95 : vector<1x32xf32>
    %c3_38 = arith.constant 3 : index
    %c0_39 = arith.constant 0 : index
    %97 = vector.load %arg10[%c3_38, %c0_39] : memref<8x32xf32, #tpu.memory_space<vmem>>, vector<1x32xf32>
    tpu.vector_store %arg10[%c3_38, %c0_39], %96 {strides = array<i32>} : memref<8x32xf32, #tpu.memory_space<vmem>>, vector<1x32xf32>,
    %98 = vector.extract_strided_slice %56 {offsets = [4, 0], sizes = [1, 32], strides = [1, 1]} : vector<8x32xf32> to vector<1x32xf32>
    %cst_40 = arith.constant dense<0.000000e+00> : vector<1x32xf32>
    %99 = tpu.matmul %92, %57, %cst_40 {dimension_numbers = #tpu.dot_dimension_numbers<[1], [0], [0], [1], [0, 0, 1, 1], [], []>} : vector<1x32xf32>, vector<32x32xf32>, vector<1x32xf32> -> vector<1x32xf32>
    %100 = arith.addf %98, %99 : vector<1x32xf32>
    %101 = math.tanh %100 : vector<1x32xf32>
    %102 = tpu.concatenate %101, %96 in 1 : vector<1x32xf32>, vector<1x32xf32> -> vector<1x64xf32>
    %cst_41 = arith.constant dense<0.000000e+00> : vector<1x32xf32>
    %103 = tpu.matmul %102, %58, %cst_41 {dimension_numbers = #tpu.dot_dimension_numbers<[1], [0], [0], [1], [0, 0, 1, 1], [], []>} : vector<1x64xf32>, vector<64x32xf32>, vector<1x32xf32> -> vector<1x32xf32>
    %104 = arith.addf %103, %59 : vector<1x32xf32>
    %105 = math.tanh %104 : vector<1x32xf32>
    %c4_42 = arith.constant 4 : index
    %c0_43 = arith.constant 0 : index
    %106 = vector.load %arg10[%c4_42, %c0_43] : memref<8x32xf32, #tpu.memory_space<vmem>>, vector<1x32xf32>
    tpu.vector_store %arg10[%c4_42, %c0_43], %105 {strides = array<i32>} : memref<8x32xf32, #tpu.memory_space<vmem>>, vector<1x32xf32>,
    %107 = vector.extract_strided_slice %56 {offsets = [5, 0], sizes = [1, 32], strides = [1, 1]} : vector<8x32xf32> to vector<1x32xf32>
    %cst_44 = arith.constant dense<0.000000e+00> : vector<1x32xf32>
    %108 = tpu.matmul %101, %57, %cst_44 {dimension_numbers = #tpu.dot_dimension_numbers<[1], [0], [0], [1], [0, 0, 1, 1], [], []>} : vector<1x32xf32>, vector<32x32xf32>, vector<1x32xf32> -> vector<1x32xf32>
    %109 = arith.addf %107, %108 : vector<1x32xf32>
    %110 = math.tanh %109 : vector<1x32xf32>
    %111 = tpu.concatenate %110, %105 in 1 : vector<1x32xf32>, vector<1x32xf32> -> vector<1x64xf32>
    %cst_45 = arith.constant dense<0.000000e+00> : vector<1x32xf32>
    %112 = tpu.matmul %111, %58, %cst_45 {dimension_numbers = #tpu.dot_dimension_numbers<[1], [0], [0], [1], [0, 0, 1, 1], [], []>} : vector<1x64xf32>, vector<64x32xf32>, vector<1x32xf32> -> vector<1x32xf32>
    %113 = arith.addf %112, %59 : vector<1x32xf32>
    %114 = math.tanh %113 : vector<1x32xf32>
    %c5_46 = arith.constant 5 : index
    %c0_47 = arith.constant 0 : index
    %115 = vector.load %arg10[%c5_46, %c0_47] : memref<8x32xf32, #tpu.memory_space<vmem>>, vector<1x32xf32>
    tpu.vector_store %arg10[%c5_46, %c0_47], %114 {strides = array<i32>} : memref<8x32xf32, #tpu.memory_space<vmem>>, vector<1x32xf32>,
    %116 = vector.extract_strided_slice %56 {offsets = [6, 0], sizes = [1, 32], strides = [1, 1]} : vector<8x32xf32> to vector<1x32xf32>
    %cst_48 = arith.constant dense<0.000000e+00> : vector<1x32xf32>
    %117 = tpu.matmul %110, %57, %cst_48 {dimension_numbers = #tpu.dot_dimension_numbers<[1], [0], [0], [1], [0, 0, 1, 1], [], []>} : vector<1x32xf32>, vector<32x32xf32>, vector<1x32xf32> -> vector<1x32xf32>
    %118 = arith.addf %116, %117 : vector<1x32xf32>
    %119 = math.tanh %118 : vector<1x32xf32>
    %120 = tpu.concatenate %119, %114 in 1 : vector<1x32xf32>, vector<1x32xf32> -> vector<1x64xf32>
    %cst_49 = arith.constant dense<0.000000e+00> : vector<1x32xf32>
    %121 = tpu.matmul %120, %58, %cst_49 {dimension_numbers = #tpu.dot_dimension_numbers<[1], [0], [0], [1], [0, 0, 1, 1], [], []>} : vector<1x64xf32>, vector<64x32xf32>, vector<1x32xf32> -> vector<1x32xf32>
    %122 = arith.addf %121, %59 : vector<1x32xf32>
    %123 = math.tanh %122 : vector<1x32xf32>
    %c6_50 = arith.constant 6 : index
    %c0_51 = arith.constant 0 : index
    %124 = vector.load %arg10[%c6_50, %c0_51] : memref<8x32xf32, #tpu.memory_space<vmem>>, vector<1x32xf32>
    tpu.vector_store %arg10[%c6_50, %c0_51], %123 {strides = array<i32>} : memref<8x32xf32, #tpu.memory_space<vmem>>, vector<1x32xf32>,
    %125 = vector.extract_strided_slice %56 {offsets = [7, 0], sizes = [1, 32], strides = [1, 1]} : vector<8x32xf32> to vector<1x32xf32>
    %cst_52 = arith.constant dense<0.000000e+00> : vector<1x32xf32>
    %126 = tpu.matmul %119, %57, %cst_52 {dimension_numbers = #tpu.dot_dimension_numbers<[1], [0], [0], [1], [0, 0, 1, 1], [], []>} : vector<1x32xf32>, vector<32x32xf32>, vector<1x32xf32> -> vector<1x32xf32>
    %127 = arith.addf %125, %126 : vector<1x32xf32>
    %128 = math.tanh %127 : vector<1x32xf32>
    %129 = tpu.concatenate %128, %123 in 1 : vector<1x32xf32>, vector<1x32xf32> -> vector<1x64xf32>
    %cst_53 = arith.constant dense<0.000000e+00> : vector<1x32xf32>
    %130 = tpu.matmul %129, %58, %cst_53 {dimension_numbers = #tpu.dot_dimension_numbers<[1], [0], [0], [1], [0, 0, 1, 1], [], []>} : vector<1x64xf32>, vector<64x32xf32>, vector<1x32xf32> -> vector<1x32xf32>
    %131 = arith.addf %130, %59 : vector<1x32xf32>
    %132 = math.tanh %131 : vector<1x32xf32>
    %c7_54 = arith.constant 7 : index
    %c0_55 = arith.constant 0 : index
    %133 = vector.load %arg10[%c7_54, %c0_55] : memref<8x32xf32, #tpu.memory_space<vmem>>, vector<1x32xf32>
    tpu.vector_store %arg10[%c7_54, %c0_55], %132 {strides = array<i32>} : memref<8x32xf32, #tpu.memory_space<vmem>>, vector<1x32xf32>,
    %c0_56 = arith.constant 0 : index
    %c0_57 = arith.constant 0 : index
    %134 = vector.load %arg10[%c0_56, %c0_57] : memref<8x32xf32, #tpu.memory_space<vmem>>, vector<8x32xf32>
    %c0_58 = arith.constant 0 : index
    %c0_59 = arith.constant 0 : index
    %135 = vector.load %arg7[%c0_58, %c0_59] : memref<32x1xf32, #tpu.memory_space<vmem>>, vector<32x1xf32>
    %cst_60 = arith.constant dense<0.000000e+00> : vector<8x1xf32>
    %136 = tpu.matmul %134, %135, %cst_60 {dimension_numbers = #tpu.dot_dimension_numbers<[1], [0], [0], [1], [0, 0, 1, 1], [], []>} : vector<8x32xf32>, vector<32x1xf32>, vector<8x1xf32> -> vector<8x1xf32>
    %c0_61 = arith.constant 0 : index
    %c0_62 = arith.constant 0 : index
    %137 = vector.load %arg8[%c0_61, %c0_62] : memref<1x1xf32, #tpu.memory_space<vmem>>, vector<1x1xf32>
    %138 = vector.broadcast %137 : vector<1x1xf32> to vector<8x1xf32>
    %139 = arith.addf %136, %138 : vector<8x1xf32>
    %140 = arith.negf %139 : vector<8x1xf32>
    %141 = math.exp %140 : vector<8x1xf32>
    %cst_63 = arith.constant 1.000000e+00 : f32
    %142 = vector.broadcast %cst_63 : f32 to vector<8x1xf32>
    %143 = arith.addf %142, %141 : vector<8x1xf32>
    %144 = arith.divf %142, %143 : vector<8x1xf32>
    %c0_64 = arith.constant 0 : index
    %c0_65 = arith.constant 0 : index
    %145 = vector.load %arg9[%c0_64, %c0_65] : memref<8x1xf32, #tpu.memory_space<vmem>>, vector<8x1xf32>
    tpu.vector_store %arg9[%c0_64, %c0_65], %144 {strides = array<i32>} : memref<8x1xf32, #tpu.memory_space<vmem>>, vector<8x1xf32>,
    return
  }
}

</mosaic_0001>

<llo_original>
// kernel: tpu_custom_call.1
$region0: #{tpu_custom_call.1}
  #allocation0 [shape = 'u32[]', space=smem, size = 0x4, offset = 0x4, fixed_abs, tag = 'smem constant byte address 0x4 - core index']
  #allocation1 [shape = 'u32[144,128]{1,0:T(1,128)}', space=vmem, size = 0x12000, scoped, tag = 'internal scratch']
  #allocation2 [shape = 'f32[8,32]{1,0:T(8,128)}', space=vmem, size = 0x1000, scoped, tag = 'scratch operand']
  #allocation3 [shape = 'f32[1,1]{1,0:T(1,128)S(1)}', space=vmem, size = 0x200, scoped, tag = 'scoped memory for tpu_custom_call.1']
  %s0 = inlined_call_operand.vmem [shape: s32[8,8], index: 0, kind: input, shape index: {}]
  %s1 = inlined_call_operand.vmem [shape: f32[30,32], index: 1, kind: input, shape index: {}]
  %s2 = inlined_call_operand.vmem [shape: f32[32,32], index: 2, kind: input, shape index: {}]
  %s3 = inlined_call_operand.vmem [shape: f32[32,32], index: 3, kind: input, shape index: {}]
  %s4 = inlined_call_operand.vmem [shape: f32[1,32], index: 4, kind: input, shape index: {}]
  %s5 = inlined_call_operand.vmem [shape: f32[64,32], index: 5, kind: input, shape index: {}]
  %s6 = inlined_call_operand.vmem [shape: f32[1,32], index: 6, kind: input, shape index: {}]
  %s7 = inlined_call_operand.vmem [shape: f32[32,1], index: 7, kind: input, shape index: {}]
  %s8 = inlined_call_operand.<no memory space> [shape: f32[1,1], index: 8, kind: input, shape index: {}]
  %s9 = inlined_call_operand.vmem [shape: f32[8,1], index: 9, kind: output, shape index: {}]
  %s10 = sld [smem:[#allocation0]]
  $region46: #{tpu_custom_call.1} parent=0
    _
  %s12 = ssub.s32 1, %s10
  %s13 = scalar_select 0, %s12, %s10
  %v14 = vstv %s8
  %15 = vst [vmem:[#allocation3] sm:$0x1] %v14
  // Predicated region
  $region2: #{tpu_custom_call.1} parent=0 // pred_check
    _
  $region3: #{tpu_custom_call.1} parent=0 // pred_check_branch
    %17 = sbr.rel (0) target = $region5
  $region4: #{tpu_custom_call.1} parent=0 // pred_region
    _
  $region5: #{tpu_custom_call.1} parent=0 // pred_fallthru
    _
  // Predicated region
  $region6: #{tpu_custom_call.1} parent=0 // pred_check
    _
  $region7: #{tpu_custom_call.1} parent=0 // pred_check_branch
    %19 = sbr.rel (0) target = $region9
  $region8: #{tpu_custom_call.1} parent=0 // pred_region
    _
  $region9: #{tpu_custom_call.1} parent=0 // pred_fallthru
    _
  // Predicated region
  $region10: #{tpu_custom_call.1} parent=0 // pred_check
    _
  $region11: #{tpu_custom_call.1} parent=0 // pred_check_branch
    %21 = sbr.rel (0) target = $region13
  $region12: #{tpu_custom_call.1} parent=0 // pred_region
    _
  $region13: #{tpu_custom_call.1} parent=0 // pred_fallthru
    _
  // Predicated region
  $region14: #{tpu_custom_call.1} parent=0 // pred_check
    _
  $region15: #{tpu_custom_call.1} parent=0 // pred_check_branch
    %23 = sbr.rel (0) target = $region17
  $region16: #{tpu_custom_call.1} parent=0 // pred_region
    _
  $region17: #{tpu_custom_call.1} parent=0 // pred_fallthru
    _
  // Predicated region
  $region18: #{tpu_custom_call.1} parent=0 // pred_check
    _
  $region19: #{tpu_custom_call.1} parent=0 // pred_check_branch
    %25 = sbr.rel (0) target = $region21
  $region20: #{tpu_custom_call.1} parent=0 // pred_region
    _
  $region21: #{tpu_custom_call.1} parent=0 // pred_fallthru
    _
  // Predicated region
  $region22: #{tpu_custom_call.1} parent=0 // pred_check
    _
  $region23: #{tpu_custom_call.1} parent=0 // pred_check_branch
    %27 = sbr.rel (0) target = $region25
  $region24: #{tpu_custom_call.1} parent=0 // pred_region
    _
  $region25: #{tpu_custom_call.1} parent=0 // pred_fallthru
    _
  // Predicated region
  $region26: #{tpu_custom_call.1} parent=0 // pred_check
    _
  $region27: #{tpu_custom_call.1} parent=0 // pred_check_branch
    %29 = sbr.rel (0) target = $region29
  $region28: #{tpu_custom_call.1} parent=0 // pred_region
    _
  $region29: #{tpu_custom_call.1} parent=0 // pred_fallthru
    _
  // Predicated region
  $region30: #{tpu_custom_call.1} parent=0 // pred_check
    _
  $region31: #{tpu_custom_call.1} parent=0 // pred_check_branch
    %31 = sbr.rel (0) target = $region33
  $region32: #{tpu_custom_call.1} parent=0 // pred_region
    _
  $region33: #{tpu_custom_call.1} parent=0 // pred_fallthru
    _
  // Predicated region
  $region34: #{tpu_custom_call.1} parent=0 // pred_check
    _
  $region35: #{tpu_custom_call.1} parent=0 // pred_check_branch
    %33 = sbr.rel (0) target = $region37
  $region36: #{tpu_custom_call.1} parent=0 // pred_region
    _
  $region37: #{tpu_custom_call.1} parent=0 // pred_fallthru
    _
  %v34 = vlaneseq
  %v35 = vand.u32 %v34, 127
  %v36 = vld [vmem:[%s0] sm:$0xff]
  %37 = vset.pattern.permute.xlu0 0
  %38 = vperm.xlu0 %37, %v36
  %v39 = vpop.permute.xlu0 %38
  %vm40 = vcmp.eq.s32.totalorder %v39, %v35
  %v41 = vsel %vm40, 1, 0
  %v42 = vcvt.s32.f32 %v41
  %43 = vset.pattern.permute.xlu0 1
  %44 = vperm.xlu0 %43, %v36
  %v45 = vpop.permute.xlu0 %44
  %vm46 = vcmp.eq.s32.totalorder %v45, %v35
  %v47 = vsel %vm46, 1, 0
  %v48 = vcvt.s32.f32 %v47
  %v49 = vadd.f32 %v42, %v48
  %50 = vset.pattern.permute.xlu0 2
  %51 = vperm.xlu0 %50, %v36
  %v52 = vpop.permute.xlu0 %51
  %vm53 = vcmp.eq.s32.totalorder %v52, %v35
  %v54 = vsel %vm53, 1, 0
  %v55 = vcvt.s32.f32 %v54
  %v56 = vadd.f32 %v49, %v55
  %57 = vset.pattern.permute.xlu0 3
  %58 = vperm.xlu0 %57, %v36
  %v59 = vpop.permute.xlu0 %58
  %vm60 = vcmp.eq.s32.totalorder %v59, %v35
  %v61 = vsel %vm60, 1, 0
  %v62 = vcvt.s32.f32 %v61
  %v63 = vadd.f32 %v56, %v62
  %64 = vset.pattern.permute.xlu0 4
  %65 = vperm.xlu0 %64, %v36
  %v66 = vpop.permute.xlu0 %65
  %vm67 = vcmp.eq.s32.totalorder %v66, %v35
  %v68 = vsel %vm67, 1, 0
  %v69 = vcvt.s32.f32 %v68
  %v70 = vadd.f32 %v63, %v69
  %71 = vset.pattern.permute.xlu0 5
  %72 = vperm.xlu0 %71, %v36
  %v73 = vpop.permute.xlu0 %72
  %vm74 = vcmp.eq.s32.totalorder %v73, %v35
  %v75 = vsel %vm74, 1, 0
  %v76 = vcvt.s32.f32 %v75
  %v77 = vadd.f32 %v70, %v76
  %78 = vset.pattern.permute.xlu0 6
  %79 = vperm.xlu0 %78, %v36
  %v80 = vpop.permute.xlu0 %79
  %vm81 = vcmp.eq.s32.totalorder %v80, %v35
  %v82 = vsel %vm81, 1, 0
  %v83 = vcvt.s32.f32 %v82
  %v84 = vadd.f32 %v77, %v83
  %85 = vset.pattern.permute.xlu0 7
  %86 = vperm.xlu0 %85, %v36
  %v87 = vpop.permute.xlu0 %86
  %vm88 = vcmp.eq.s32.totalorder %v87, %v35
  %v89 = vsel %vm88, 1, 0
  %v90 = vcvt.s32.f32 %v89
  %v91 = vadd.f32 %v84, %v90
  %v92 = vld [vmem:[%s1] sm:$0xff]
  %v93 = vld [vmem:[%s1 + $0x8] sm:$0xff]
  %v94 = vld [vmem:[%s1 + $0x10] sm:$0xff]
  %v95 = vld [vmem:[%s1 + $0x18] sm:$0x3f]
  %vm96 = vcmask 244736
  %v98 = vsel %vm96, %v91, 0
  %vm100 = vcmask 1045504
  %v102 = vsel %vm100, %v95, 0
  %104 = vmatprep.subr.mxu0 0.0
  %105 = vmatpush1.msra.mxu0 %v92
  %106 = vmatprep.subr.mxu0 0.0
  %107 = vmatpush1.msra.mxu0 %v93
  %108 = vmatprep.subr.mxu0 0.0
  %109 = vmatpush1.msra.mxu0 %v94
  %110 = vmatprep.subr.mxu0 0.0
  %111 = vmatpush1.msra.mxu0 %v102
  %112 = vmatprep.subr.mxu0 0.0
  %113 = vmatpush1.msra.mxu0 0.0
  %114 = vmatprep.subr.mxu0 0.0
  %115 = vmatpush1.msra.mxu0 0.0
  %116 = vmatprep.subr.mxu0 0.0
  %117 = vmatpush1.msra.mxu0 0.0
  %118 = vmatprep.subr.mxu0 0.0
  %119 = vmatpush1.msra.mxu0 0.0
  %120 = vmatprep.subr.mxu0 0.0
  %121 = vmatpush1.msra.mxu0 0.0
  %122 = vmatprep.subr.mxu0 0.0
  %123 = vmatpush1.msra.mxu0 0.0
  %124 = vmatprep.subr.mxu0 0.0
  %125 = vmatpush1.msra.mxu0 0.0
  %126 = vmatprep.subr.mxu0 0.0
  %127 = vmatpush1.msra.mxu0 0.0
  %128 = vmatprep.subr.mxu0 0.0
  %129 = vmatpush1.msra.mxu0 0.0
  %130 = vmatprep.subr.mxu0 0.0
  %131 = vmatpush1.msra.mxu0 0.0
  %132 = vmatprep.subr.mxu0 0.0
  %133 = vmatpush1.msra.mxu0 0.0
  %134 = vmatprep.subr.mxu0 0.0
  %135 = vmatpush1.msra.mxu0 0.0
  %136 = vmatprep.subr.mxu0 0.0
  %137 = vmatpush1.msra.mxu0 0.0
  %138 = vmatprep.subr.mxu0 0.0
  %139 = vmatpush1.msra.mxu0 0.0
  %140 = vmatprep.subr.mxu0 0.0
  %141 = vmatpush1.msra.mxu0 0.0
  %142 = vmatprep.subr.mxu0 0.0
  %143 = vmatpush1.msra.mxu0 0.0
  %144 = vmatprep.subr.mxu0 0.0
  %145 = vmatpush1.msra.mxu0 0.0
  %146 = vmatprep.subr.mxu0 0.0
  %147 = vmatpush1.msra.mxu0 0.0
  %148 = vmatprep.subr.mxu0 0.0
  %149 = vmatpush1.msra.mxu0 0.0
  %150 = vmatprep.subr.mxu0 0.0
  %151 = vmatpush1.msra.mxu0 0.0
  %152 = vmatprep.subr.mxu0 0.0
  %153 = vmatpush1.msra.mxu0 0.0
  %154 = vmatprep.subr.mxu0 0.0
  %155 = vmatpush1.msra.mxu0 0.0
  %156 = vmatprep.subr.mxu0 0.0
  %157 = vmatpush1.msra.mxu0 0.0
  %158 = vmatprep.subr.mxu0 0.0
  %159 = vmatpush1.msra.mxu0 0.0
  %160 = vmatprep.subr.mxu0 0.0
  %161 = vmatpush1.msra.mxu0 0.0
  %162 = vmatprep.subr.mxu0 0.0
  %163 = vmatpush1.msra.mxu0 0.0
  %164 = vmatprep.subr.mxu0 0.0
  %165 = vmatpush1.msra.mxu0 0.0
  %166 = vmatprep.subr.mxu0 0.0
  %167 = vmatpush1.msra.mxu0 0.0
  %168 = vmatprep.mubr.f32.mxu0 0.0
  %169 = vmatmul.mubr.f32.gmra.mrb[0].mxu0 %v98
  %v170 = vpop.f32.mrb[0].mxu0
  %v171 = vadd.f32 0.0, %v170
  %v172 = vpop.f32.mrb[0].mxu0
  %173 = vdwg.mxu0
  %v174 = vmul.f32 %v171, 0.125
  %v175 = vld [vmem:[%s2] sm:$0xff]
  %v176 = vld [vmem:[%s2 + $0x8] sm:$0xff]
  %v177 = vld [vmem:[%s2 + $0x10] sm:$0xff]
  %v178 = vld [vmem:[%s2 + $0x18] sm:$0xff]
  %v179 = vld [vmem:[%s4] sm:$0x1]
  %v181 = vlaneseq
  %v182 = vshrl.u32 %v181, 7
  %v183 = vsub.s32 0, %v182
  %v184 = vrot.slane %v179, %v183
  %vm186 = vcmask 261120
  %v188 = vsel %vm186, %v174, 0
  %190 = vmatprep.subr.mxu0 0.0
  %191 = vmatpush1.msra.mxu0 %v175
  %192 = vmatprep.subr.mxu0 0.0
  %193 = vmatpush1.msra.mxu0 %v176
  %194 = vmatprep.subr.mxu0 0.0
  %195 = vmatpush1.msra.mxu0 %v177
  %196 = vmatprep.subr.mxu0 0.0
  %197 = vmatpush1.msra.mxu0 %v178
  %198 = vmatprep.subr.mxu0 0.0
  %199 = vmatpush1.msra.mxu0 0.0
  %200 = vmatprep.subr.mxu0 0.0
  %201 = vmatpush1.msra.mxu0 0.0
  %202 = vmatprep.subr.mxu0 0.0
  %203 = vmatpush1.msra.mxu0 0.0
  %204 = vmatprep.subr.mxu0 0.0
  %205 = vmatpush1.msra.mxu0 0.0
  %206 = vmatprep.subr.mxu0 0.0
  %207 = vmatpush1.msra.mxu0 0.0
  %208 = vmatprep.subr.mxu0 0.0
  %209 = vmatpush1.msra.mxu0 0.0
  %210 = vmatprep.subr.mxu0 0.0
  %211 = vmatpush1.msra.mxu0 0.0
  %212 = vmatprep.subr.mxu0 0.0
  %213 = vmatpush1.msra.mxu0 0.0
  %214 = vmatprep.subr.mxu0 0.0
  %215 = vmatpush1.msra.mxu0 0.0
  %216 = vmatprep.subr.mxu0 0.0
  %217 = vmatpush1.msra.mxu0 0.0
  %218 = vmatprep.subr.mxu0 0.0
  %219 = vmatpush1.msra.mxu0 0.0
  %220 = vmatprep.subr.mxu0 0.0
  %221 = vmatpush1.msra.mxu0 0.0
  %222 = vmatprep.subr.mxu0 0.0
  %223 = vmatpush1.msra.mxu0 0.0
  %224 = vmatprep.subr.mxu0 0.0
  %225 = vmatpush1.msra.mxu0 0.0
  %226 = vmatprep.subr.mxu0 0.0
  %227 = vmatpush1.msra.mxu0 0.0
  %228 = vmatprep.subr.mxu0 0.0
  %229 = vmatpush1.msra.mxu0 0.0
  %230 = vmatprep.subr.mxu0 0.0
  %231 = vmatpush1.msra.mxu0 0.0
  %232 = vmatprep.subr.mxu0 0.0
  %233 = vmatpush1.msra.mxu0 0.0
  %234 = vmatprep.subr.mxu0 0.0
  %235 = vmatpush1.msra.mxu0 0.0
  %236 = vmatprep.subr.mxu0 0.0
  %237 = vmatpush1.msra.mxu0 0.0
  %238 = vmatprep.subr.mxu0 0.0
  %239 = vmatpush1.msra.mxu0 0.0
  %240 = vmatprep.subr.mxu0 0.0
  %241 = vmatpush1.msra.mxu0 0.0
  %242 = vmatprep.subr.mxu0 0.0
  %243 = vmatpush1.msra.mxu0 0.0
  %244 = vmatprep.subr.mxu0 0.0
  %245 = vmatpush1.msra.mxu0 0.0
  %246 = vmatprep.subr.mxu0 0.0
  %247 = vmatpush1.msra.mxu0 0.0
  %248 = vmatprep.subr.mxu0 0.0
  %249 = vmatpush1.msra.mxu0 0.0
  %250 = vmatprep.subr.mxu0 0.0
  %251 = vmatpush1.msra.mxu0 0.0
  %252 = vmatprep.subr.mxu0 0.0
  %253 = vmatpush1.msra.mxu0 0.0
  %254 = vmatprep.mubr.f32.mxu0 0.0
  %255 = vmatmul.mubr.f32.gmra.mrb[0].mxu0 %v188
  %v256 = vpop.f32.mrb[0].mxu0
  %v257 = vadd.f32 %v184, %v256
  %v258 = vpop.f32.mrb[0].mxu0
  %259 = vdwg.mxu0
  %v260 = vld [vmem:[%s3] sm:$0xff]
  %v261 = vld [vmem:[%s3 + $0x8] sm:$0xff]
  %v262 = vld [vmem:[%s3 + $0x10] sm:$0xff]
  %v263 = vld [vmem:[%s3 + $0x18] sm:$0xff]
  %v264 = vld [vmem:[%s5] sm:$0xff]
  %v265 = vld [vmem:[%s5 + $0x8] sm:$0xff]
  %v266 = vld [vmem:[%s5 + $0x10] sm:$0xff]
  %v267 = vld [vmem:[%s5 + $0x18] sm:$0xff]
  %v268 = vld [vmem:[%s5 + $0x20] sm:$0xff]
  %v269 = vld [vmem:[%s5 + $0x28] sm:$0xff]
  %v270 = vld [vmem:[%s5 + $0x30] sm:$0xff]
  %v271 = vld [vmem:[%s5 + $0x38] sm:$0xff]
  %v272 = vld [vmem:[%s6] sm:$0x1]
  %v274 = vsel %vm186, 0.0, 0
  %276 = vmatprep.subr.mxu0 0.0
  %277 = vmatpush1.msra.mxu0 %v260
  %278 = vmatprep.subr.mxu0 0.0
  %279 = vmatpush1.msra.mxu0 %v261
  %280 = vmatprep.subr.mxu0 0.0
  %281 = vmatpush1.msra.mxu0 %v262
  %282 = vmatprep.subr.mxu0 0.0
  %283 = vmatpush1.msra.mxu0 %v263
  %284 = vmatprep.subr.mxu0 0.0
  %285 = vmatpush1.msra.mxu0 0.0
  %286 = vmatprep.subr.mxu0 0.0
  %287 = vmatpush1.msra.mxu0 0.0
  %288 = vmatprep.subr.mxu0 0.0
  %289 = vmatpush1.msra.mxu0 0.0
  %290 = vmatprep.subr.mxu0 0.0
  %291 = vmatpush1.msra.mxu0 0.0
  %292 = vmatprep.subr.mxu0 0.0
  %293 = vmatpush1.msra.mxu0 0.0
  %294 = vmatprep.subr.mxu0 0.0
  %295 = vmatpush1.msra.mxu0 0.0
  %296 = vmatprep.subr.mxu0 0.0
  %297 = vmatpush1.msra.mxu0 0.0
  %298 = vmatprep.subr.mxu0 0.0
  %299 = vmatpush1.msra.mxu0 0.0
  %300 = vmatprep.subr.mxu0 0.0
  %301 = vmatpush1.msra.mxu0 0.0
  %302 = vmatprep.subr.mxu0 0.0
  %303 = vmatpush1.msra.mxu0 0.0
  %304 = vmatprep.subr.mxu0 0.0
  %305 = vmatpush1.msra.mxu0 0.0
  %306 = vmatprep.subr.mxu0 0.0
  %307 = vmatpush1.msra.mxu0 0.0
  %308 = vmatprep.subr.mxu0 0.0
  %309 = vmatpush1.msra.mxu0 0.0
  %310 = vmatprep.subr.mxu0 0.0
  %311 = vmatpush1.msra.mxu0 0.0
  %312 = vmatprep.subr.mxu0 0.0
  %313 = vmatpush1.msra.mxu0 0.0
  %314 = vmatprep.subr.mxu0 0.0
  %315 = vmatpush1.msra.mxu0 0.0
  %316 = vmatprep.subr.mxu0 0.0
  %317 = vmatpush1.msra.mxu0 0.0
  %318 = vmatprep.subr.mxu0 0.0
  %319 = vmatpush1.msra.mxu0 0.0
  %320 = vmatprep.subr.mxu0 0.0
  %321 = vmatpush1.msra.mxu0 0.0
  %322 = vmatprep.subr.mxu0 0.0
  %323 = vmatpush1.msra.mxu0 0.0
  %324 = vmatprep.subr.mxu0 0.0
  %325 = vmatpush1.msra.mxu0 0.0
  %326 = vmatprep.subr.mxu0 0.0
  %327 = vmatpush1.msra.mxu0 0.0
  %328 = vmatprep.subr.mxu0 0.0
  %329 = vmatpush1.msra.mxu0 0.0
  %330 = vmatprep.subr.mxu0 0.0
  %331 = vmatpush1.msra.mxu0 0.0
  %332 = vmatprep.subr.mxu0 0.0
  %333 = vmatpush1.msra.mxu0 0.0
  %334 = vmatprep.subr.mxu0 0.0
  %335 = vmatpush1.msra.mxu0 0.0
  %336 = vmatprep.subr.mxu0 0.0
  %337 = vmatpush1.msra.mxu0 0.0
  %338 = vmatprep.subr.mxu0 0.0
  %339 = vmatpush1.msra.mxu0 0.0
  %340 = vmatprep.mubr.f32.mxu0 0.0
  %341 = vmatmul.mubr.f32.gmra.mrb[0].mxu0 %v274
  %v342 = vpop.f32.mrb[0].mxu0
  %v343 = vadd.f32 0.0, %v342
  %v344 = vpop.f32.mrb[0].mxu0
  %345 = vdwg.mxu0
  %v346 = vadd.f32 %v257, %v343
  %v347 = vtanh.pop %v346
  %v348 = vsel %vm186, %v347, 0.0
  %vm349 = vcmask 523264
  %v351 = vsel %vm349, %v348, 0
  %353 = vmatprep.subr.mxu0 0.0
  %354 = vmatpush1.msra.mxu0 %v264
  %355 = vmatprep.subr.mxu0 0.0
  %356 = vmatpush1.msra.mxu0 %v265
  %357 = vmatprep.subr.mxu0 0.0
  %358 = vmatpush1.msra.mxu0 %v266
  %359 = vmatprep.subr.mxu0 0.0
  %360 = vmatpush1.msra.mxu0 %v267
  %361 = vmatprep.subr.mxu0 0.0
  %362 = vmatpush1.msra.mxu0 %v268
  %363 = vmatprep.subr.mxu0 0.0
  %364 = vmatpush1.msra.mxu0 %v269
  %365 = vmatprep.subr.mxu0 0.0
  %366 = vmatpush1.msra.mxu0 %v270
  %367 = vmatprep.subr.mxu0 0.0
  %368 = vmatpush1.msra.mxu0 %v271
  %369 = vmatprep.subr.mxu0 0.0
  %370 = vmatpush1.msra.mxu0 0.0
  %371 = vmatprep.subr.mxu0 0.0
  %372 = vmatpush1.msra.mxu0 0.0
  %373 = vmatprep.subr.mxu0 0.0
  %374 = vmatpush1.msra.mxu0 0.0
  %375 = vmatprep.subr.mxu0 0.0
  %376 = vmatpush1.msra.mxu0 0.0
  %377 = vmatprep.subr.mxu0 0.0
  %378 = vmatpush1.msra.mxu0 0.0
  %379 = vmatprep.subr.mxu0 0.0
  %380 = vmatpush1.msra.mxu0 0.0
  %381 = vmatprep.subr.mxu0 0.0
  %382 = vmatpush1.msra.mxu0 0.0
  %383 = vmatprep.subr.mxu0 0.0
  %384 = vmatpush1.msra.mxu0 0.0
  %385 = vmatprep.subr.mxu0 0.0
  %386 = vmatpush1.msra.mxu0 0.0
  %387 = vmatprep.subr.mxu0 0.0
  %388 = vmatpush1.msra.mxu0 0.0
  %389 = vmatprep.subr.mxu0 0.0
  %390 = vmatpush1.msra.mxu0 0.0
  %391 = vmatprep.subr.mxu0 0.0
  %392 = vmatpush1.msra.mxu0 0.0
  %393 = vmatprep.subr.mxu0 0.0
  %394 = vmatpush1.msra.mxu0 0.0
  %395 = vmatprep.subr.mxu0 0.0
  %396 = vmatpush1.msra.mxu0 0.0
  %397 = vmatprep.subr.mxu0 0.0
  %398 = vmatpush1.msra.mxu0 0.0
  %399 = vmatprep.subr.mxu0 0.0
  %400 = vmatpush1.msra.mxu0 0.0
  %401 = vmatprep.subr.mxu0 0.0
  %402 = vmatpush1.msra.mxu0 0.0
  %403 = vmatprep.subr.mxu0 0.0
  %404 = vmatpush1.msra.mxu0 0.0
  %405 = vmatprep.subr.mxu0 0.0
  %406 = vmatpush1.msra.mxu0 0.0
  %407 = vmatprep.subr.mxu0 0.0
  %408 = vmatpush1.msra.mxu0 0.0
  %409 = vmatprep.subr.mxu0 0.0
  %410 = vmatpush1.msra.mxu0 0.0
  %411 = vmatprep.subr.mxu0 0.0
  %412 = vmatpush1.msra.mxu0 0.0
  %413 = vmatprep.subr.mxu0 0.0
  %414 = vmatpush1.msra.mxu0 0.0
  %415 = vmatprep.subr.mxu0 0.0
  %416 = vmatpush1.msra.mxu0 0.0
  %417 = vmatprep.mubr.f32.mxu0 0.0
  %418 = vmatmul.mubr.f32.gmra.mrb[0].mxu0 %v351
  %v419 = vpop.f32.mrb[0].mxu0
  %v420 = vadd.f32 %v272, %v419
  %v421 = vpop.f32.mrb[0].mxu0
  %422 = vdwg.mxu0
  %v423 = vtanh.pop %v420
  %vm424 = vcmask 253952
  %425 = vst.msk [vmem:[#allocation2] sm:$0x1] %vm424, %v423
  %v427 = vsel %vm186, %v347, 0
  %429 = vmatprep.subr.mxu0 0.0
  %430 = vmatpush1.msra.mxu0 %v260
  %431 = vmatprep.subr.mxu0 0.0
  %432 = vmatpush1.msra.mxu0 %v261
  %433 = vmatprep.subr.mxu0 0.0
  %434 = vmatpush1.msra.mxu0 %v262
  %435 = vmatprep.subr.mxu0 0.0
  %436 = vmatpush1.msra.mxu0 %v263
  %437 = vmatprep.subr.mxu0 0.0
  %438 = vmatpush1.msra.mxu0 0.0
  %439 = vmatprep.subr.mxu0 0.0
  %440 = vmatpush1.msra.mxu0 0.0
  %441 = vmatprep.subr.mxu0 0.0
  %442 = vmatpush1.msra.mxu0 0.0
  %443 = vmatprep.subr.mxu0 0.0
  %444 = vmatpush1.msra.mxu0 0.0
  %445 = vmatprep.subr.mxu0 0.0
  %446 = vmatpush1.msra.mxu0 0.0
  %447 = vmatprep.subr.mxu0 0.0
  %448 = vmatpush1.msra.mxu0 0.0
  %449 = vmatprep.subr.mxu0 0.0
  %450 = vmatpush1.msra.mxu0 0.0
  %451 = vmatprep.subr.mxu0 0.0
  %452 = vmatpush1.msra.mxu0 0.0
  %453 = vmatprep.subr.mxu0 0.0
  %454 = vmatpush1.msra.mxu0 0.0
  %455 = vmatprep.subr.mxu0 0.0
  %456 = vmatpush1.msra.mxu0 0.0
  %457 = vmatprep.subr.mxu0 0.0
  %458 = vmatpush1.msra.mxu0 0.0
  %459 = vmatprep.subr.mxu0 0.0
  %460 = vmatpush1.msra.mxu0 0.0
  %461 = vmatprep.subr.mxu0 0.0
  %462 = vmatpush1.msra.mxu0 0.0
  %463 = vmatprep.subr.mxu0 0.0
  %464 = vmatpush1.msra.mxu0 0.0
  %465 = vmatprep.subr.mxu0 0.0
  %466 = vmatpush1.msra.mxu0 0.0
  %467 = vmatprep.subr.mxu0 0.0
  %468 = vmatpush1.msra.mxu0 0.0
  %469 = vmatprep.subr.mxu0 0.0
  %470 = vmatpush1.msra.mxu0 0.0
  %471 = vmatprep.subr.mxu0 0.0
  %472 = vmatpush1.msra.mxu0 0.0
  %473 = vmatprep.subr.mxu0 0.0
  %474 = vmatpush1.msra.mxu0 0.0
  %475 = vmatprep.subr.mxu0 0.0
  %476 = vmatpush1.msra.mxu0 0.0
  %477 = vmatprep.subr.mxu0 0.0
  %478 = vmatpush1.msra.mxu0 0.0
  %479 = vmatprep.subr.mxu0 0.0
  %480 = vmatpush1.msra.mxu0 0.0
  %481 = vmatprep.subr.mxu0 0.0
  %482 = vmatpush1.msra.mxu0 0.0
  %483 = vmatprep.subr.mxu0 0.0
  %484 = vmatpush1.msra.mxu0 0.0
  %485 = vmatprep.subr.mxu0 0.0
  %486 = vmatpush1.msra.mxu0 0.0
  %487 = vmatprep.subr.mxu0 0.0
  %488 = vmatpush1.msra.mxu0 0.0
  %489 = vmatprep.subr.mxu0 0.0
  %490 = vmatpush1.msra.mxu0 0.0
  %491 = vmatprep.subr.mxu0 0.0
  %492 = vmatpush1.msra.mxu0 0.0
  %493 = vmatprep.mubr.f32.mxu0 0.0
  %494 = vmatmul.mubr.f32.gmra.mrb[0].mxu0 %v427
  %v495 = vpop.f32.mrb[0].mxu0
  %v496 = vadd.f32 0.0, %v495
  %v497 = vpop.f32.mrb[0].mxu0
  %498 = vdwg.mxu0
  %v500 = vrot.slane %v496, 7
  %v502 = vadd.f32 %v257, %v500
  %v503 = vtanh.pop %v502
  %v505 = vrot.slane %v423, 7
  %506 = vrot.lane.b32.xlu0 %v505, 32
  %v507 = vpop.permute.xlu0 %506
  %v509 = vsel %vm186, %v503, %v507
  %v511 = vrot.slane %v509, 1
  %v512 = vsel %vm349, %v511, 0
  %514 = vmatprep.subr.mxu0 0.0
  %515 = vmatpush1.msra.mxu0 %v264
  %516 = vmatprep.subr.mxu0 0.0
  %517 = vmatpush1.msra.mxu0 %v265
  %518 = vmatprep.subr.mxu0 0.0
  %519 = vmatpush1.msra.mxu0 %v266
  %520 = vmatprep.subr.mxu0 0.0
  %521 = vmatpush1.msra.mxu0 %v267
  %522 = vmatprep.subr.mxu0 0.0
  %523 = vmatpush1.msra.mxu0 %v268
  %524 = vmatprep.subr.mxu0 0.0
  %525 = vmatpush1.msra.mxu0 %v269
  %526 = vmatprep.subr.mxu0 0.0
  %527 = vmatpush1.msra.mxu0 %v270
  %528 = vmatprep.subr.mxu0 0.0
  %529 = vmatpush1.msra.mxu0 %v271
  %530 = vmatprep.subr.mxu0 0.0
  %531 = vmatpush1.msra.mxu0 0.0
  %532 = vmatprep.subr.mxu0 0.0
  %533 = vmatpush1.msra.mxu0 0.0
  %534 = vmatprep.subr.mxu0 0.0
  %535 = vmatpush1.msra.mxu0 0.0
  %536 = vmatprep.subr.mxu0 0.0
  %537 = vmatpush1.msra.mxu0 0.0
  %538 = vmatprep.subr.mxu0 0.0
  %539 = vmatpush1.msra.mxu0 0.0
  %540 = vmatprep.subr.mxu0 0.0
  %541 = vmatpush1.msra.mxu0 0.0
  %542 = vmatprep.subr.mxu0 0.0
  %543 = vmatpush1.msra.mxu0 0.0
  %544 = vmatprep.subr.mxu0 0.0
  %545 = vmatpush1.msra.mxu0 0.0
  %546 = vmatprep.subr.mxu0 0.0
  %547 = vmatpush1.msra.mxu0 0.0
  %548 = vmatprep.subr.mxu0 0.0
  %549 = vmatpush1.msra.mxu0 0.0
  %550 = vmatprep.subr.mxu0 0.0
  %551 = vmatpush1.msra.mxu0 0.0
  %552 = vmatprep.subr.mxu0 0.0
  %553 = vmatpush1.msra.mxu0 0.0
  %554 = vmatprep.subr.mxu0 0.0
  %555 = vmatpush1.msra.mxu0 0.0
  %556 = vmatprep.subr.mxu0 0.0
  %557 = vmatpush1.msra.mxu0 0.0
  %558 = vmatprep.subr.mxu0 0.0
  %559 = vmatpush1.msra.mxu0 0.0
  %560 = vmatprep.subr.mxu0 0.0
  %561 = vmatpush1.msra.mxu0 0.0
  %562 = vmatprep.subr.mxu0 0.0
  %563 = vmatpush1.msra.mxu0 0.0
  %564 = vmatprep.subr.mxu0 0.0
  %565 = vmatpush1.msra.mxu0 0.0
  %566 = vmatprep.subr.mxu0 0.0
  %567 = vmatpush1.msra.mxu0 0.0
  %568 = vmatprep.subr.mxu0 0.0
  %569 = vmatpush1.msra.mxu0 0.0
  %570 = vmatprep.subr.mxu0 0.0
  %571 = vmatpush1.msra.mxu0 0.0
  %572 = vmatprep.subr.mxu0 0.0
  %573 = vmatpush1.msra.mxu0 0.0
  %574 = vmatprep.subr.mxu0 0.0
  %575 = vmatpush1.msra.mxu0 0.0
  %576 = vmatprep.subr.mxu0 0.0
  %577 = vmatpush1.msra.mxu0 0.0
  %578 = vmatprep.mubr.f32.mxu0 0.0
  %579 = vmatmul.mubr.f32.gmra.mrb[0].mxu0 %v512
  %v580 = vpop.f32.mrb[0].mxu0
  %v581 = vadd.f32 %v272, %v580
  %v582 = vpop.f32.mrb[0].mxu0
  %583 = vdwg.mxu0
  %v584 = vtanh.pop %v581
  %585 = vst.msk [vmem:[#allocation2 + $0x1] sm:$0x1] %vm424, %v584
  %v587 = vrot.slane %v503, 1
  %v588 = vsel %vm186, %v587, 0
  %590 = vmatprep.subr.mxu0 0.0
  %591 = vmatpush1.msra.mxu0 %v260
  %592 = vmatprep.subr.mxu0 0.0
  %593 = vmatpush1.msra.mxu0 %v261
  %594 = vmatprep.subr.mxu0 0.0
  %595 = vmatpush1.msra.mxu0 %v262
  %596 = vmatprep.subr.mxu0 0.0
  %597 = vmatpush1.msra.mxu0 %v263
  %598 = vmatprep.subr.mxu0 0.0
  %599 = vmatpush1.msra.mxu0 0.0
  %600 = vmatprep.subr.mxu0 0.0
  %601 = vmatpush1.msra.mxu0 0.0
  %602 = vmatprep.subr.mxu0 0.0
  %603 = vmatpush1.msra.mxu0 0.0
  %604 = vmatprep.subr.mxu0 0.0
  %605 = vmatpush1.msra.mxu0 0.0
  %606 = vmatprep.subr.mxu0 0.0
  %607 = vmatpush1.msra.mxu0 0.0
  %608 = vmatprep.subr.mxu0 0.0
  %609 = vmatpush1.msra.mxu0 0.0
  %610 = vmatprep.subr.mxu0 0.0
  %611 = vmatpush1.msra.mxu0 0.0
  %612 = vmatprep.subr.mxu0 0.0
  %613 = vmatpush1.msra.mxu0 0.0
  %614 = vmatprep.subr.mxu0 0.0
  %615 = vmatpush1.msra.mxu0 0.0
  %616 = vmatprep.subr.mxu0 0.0
  %617 = vmatpush1.msra.mxu0 0.0
  %618 = vmatprep.subr.mxu0 0.0
  %619 = vmatpush1.msra.mxu0 0.0
  %620 = vmatprep.subr.mxu0 0.0
  %621 = vmatpush1.msra.mxu0 0.0
  %622 = vmatprep.subr.mxu0 0.0
  %623 = vmatpush1.msra.mxu0 0.0
  %624 = vmatprep.subr.mxu0 0.0
  %625 = vmatpush1.msra.mxu0 0.0
  %626 = vmatprep.subr.mxu0 0.0
  %627 = vmatpush1.msra.mxu0 0.0
  %628 = vmatprep.subr.mxu0 0.0
  %629 = vmatpush1.msra.mxu0 0.0
  %630 = vmatprep.subr.mxu0 0.0
  %631 = vmatpush1.msra.mxu0 0.0
  %632 = vmatprep.subr.mxu0 0.0
  %633 = vmatpush1.msra.mxu0 0.0
  %634 = vmatprep.subr.mxu0 0.0
  %635 = vmatpush1.msra.mxu0 0.0
  %636 = vmatprep.subr.mxu0 0.0
  %637 = vmatpush1.msra.mxu0 0.0
  %638 = vmatprep.subr.mxu0 0.0
  %639 = vmatpush1.msra.mxu0 0.0
  %640 = vmatprep.subr.mxu0 0.0
  %641 = vmatpush1.msra.mxu0 0.0
  %642 = vmatprep.subr.mxu0 0.0
  %643 = vmatpush1.msra.mxu0 0.0
  %644 = vmatprep.subr.mxu0 0.0
  %645 = vmatpush1.msra.mxu0 0.0
  %646 = vmatprep.subr.mxu0 0.0
  %647 = vmatpush1.msra.mxu0 0.0
  %648 = vmatprep.subr.mxu0 0.0
  %649 = vmatpush1.msra.mxu0 0.0
  %650 = vmatprep.subr.mxu0 0.0
  %651 = vmatpush1.msra.mxu0 0.0
  %652 = vmatprep.subr.mxu0 0.0
  %653 = vmatpush1.msra.mxu0 0.0
  %654 = vmatprep.mubr.f32.mxu0 0.0
  %655 = vmatmul.mubr.f32.gmra.mrb[0].mxu0 %v588
  %v656 = vpop.f32.mrb[0].mxu0
  %v657 = vadd.f32 0.0, %v656
  %v658 = vpop.f32.mrb[0].mxu0
  %659 = vdwg.mxu0
  %v661 = vrot.slane %v657, 6
  %v663 = vadd.f32 %v257, %v661
  %v664 = vtanh.pop %v663
  %v666 = vrot.slane %v584, 6
  %667 = vrot.lane.b32.xlu0 %v666, 32
  %v668 = vpop.permute.xlu0 %667
  %v670 = vsel %vm186, %v664, %v668
  %v672 = vrot.slane %v670, 2
  %v673 = vsel %vm349, %v672, 0
  %675 = vmatprep.subr.mxu0 0.0
  %676 = vmatpush1.msra.mxu0 %v264
  %677 = vmatprep.subr.mxu0 0.0
  %678 = vmatpush1.msra.mxu0 %v265
  %679 = vmatprep.subr.mxu0 0.0
  %680 = vmatpush1.msra.mxu0 %v266
  %681 = vmatprep.subr.mxu0 0.0
  %682 = vmatpush1.msra.mxu0 %v267
  %683 = vmatprep.subr.mxu0 0.0
  %684 = vmatpush1.msra.mxu0 %v268
  %685 = vmatprep.subr.mxu0 0.0
  %686 = vmatpush1.msra.mxu0 %v269
  %687 = vmatprep.subr.mxu0 0.0
  %688 = vmatpush1.msra.mxu0 %v270
  %689 = vmatprep.subr.mxu0 0.0
  %690 = vmatpush1.msra.mxu0 %v271
  %691 = vmatprep.subr.mxu0 0.0
  %692 = vmatpush1.msra.mxu0 0.0
  %693 = vmatprep.subr.mxu0 0.0
  %694 = vmatpush1.msra.mxu0 0.0
  %695 = vmatprep.subr.mxu0 0.0
  %696 = vmatpush1.msra.mxu0 0.0
  %697 = vmatprep.subr.mxu0 0.0
  %698 = vmatpush1.msra.mxu0 0.0
  %699 = vmatprep.subr.mxu0 0.0
  %700 = vmatpush1.msra.mxu0 0.0
  %701 = vmatprep.subr.mxu0 0.0
  %702 = vmatpush1.msra.mxu0 0.0
  %703 = vmatprep.subr.mxu0 0.0
  %704 = vmatpush1.msra.mxu0 0.0
  %705 = vmatprep.subr.mxu0 0.0
  %706 = vmatpush1.msra.mxu0 0.0
  %707 = vmatprep.subr.mxu0 0.0
  %708 = vmatpush1.msra.mxu0 0.0
  %709 = vmatprep.subr.mxu0 0.0
  %710 = vmatpush1.msra.mxu0 0.0
  %711 = vmatprep.subr.mxu0 0.0
  %712 = vmatpush1.msra.mxu0 0.0
  %713 = vmatprep.subr.mxu0 0.0
  %714 = vmatpush1.msra.mxu0 0.0
  %715 = vmatprep.subr.mxu0 0.0
  %716 = vmatpush1.msra.mxu0 0.0
  %717 = vmatprep.subr.mxu0 0.0
  %718 = vmatpush1.msra.mxu0 0.0
  %719 = vmatprep.subr.mxu0 0.0
  %720 = vmatpush1.msra.mxu0 0.0
  %721 = vmatprep.subr.mxu0 0.0
  %722 = vmatpush1.msra.mxu0 0.0
  %723 = vmatprep.subr.mxu0 0.0
  %724 = vmatpush1.msra.mxu0 0.0
  %725 = vmatprep.subr.mxu0 0.0
  %726 = vmatpush1.msra.mxu0 0.0
  %727 = vmatprep.subr.mxu0 0.0
  %728 = vmatpush1.msra.mxu0 0.0
  %729 = vmatprep.subr.mxu0 0.0
  %730 = vmatpush1.msra.mxu0 0.0
  %731 = vmatprep.subr.mxu0 0.0
  %732 = vmatpush1.msra.mxu0 0.0
  %733 = vmatprep.subr.mxu0 0.0
  %734 = vmatpush1.msra.mxu0 0.0
  %735 = vmatprep.subr.mxu0 0.0
  %736 = vmatpush1.msra.mxu0 0.0
  %737 = vmatprep.subr.mxu0 0.0
  %738 = vmatpush1.msra.mxu0 0.0
  %739 = vmatprep.mubr.f32.mxu0 0.0
  %740 = vmatmul.mubr.f32.gmra.mrb[0].mxu0 %v673
  %v741 = vpop.f32.mrb[0].mxu0
  %v742 = vadd.f32 %v272, %v741
  %v743 = vpop.f32.mrb[0].mxu0
  %744 = vdwg.mxu0
  %v745 = vtanh.pop %v742
  %746 = vst.msk [vmem:[#allocation2 + $0x2] sm:$0x1] %vm424, %v745
  %v748 = vrot.slane %v664, 2
  %v749 = vsel %vm186, %v748, 0
  %751 = vmatprep.subr.mxu0 0.0
  %752 = vmatpush1.msra.mxu0 %v260
  %753 = vmatprep.subr.mxu0 0.0
  %754 = vmatpush1.msra.mxu0 %v261
  %755 = vmatprep.subr.mxu0 0.0
  %756 = vmatpush1.msra.mxu0 %v262
  %757 = vmatprep.subr.mxu0 0.0
  %758 = vmatpush1.msra.mxu0 %v263
  %759 = vmatprep.subr.mxu0 0.0
  %760 = vmatpush1.msra.mxu0 0.0
  %761 = vmatprep.subr.mxu0 0.0
  %762 = vmatpush1.msra.mxu0 0.0
  %763 = vmatprep.subr.mxu0 0.0
  %764 = vmatpush1.msra.mxu0 0.0
  %765 = vmatprep.subr.mxu0 0.0
  %766 = vmatpush1.msra.mxu0 0.0
  %767 = vmatprep.subr.mxu0 0.0
  %768 = vmatpush1.msra.mxu0 0.0
  %769 = vmatprep.subr.mxu0 0.0
  %770 = vmatpush1.msra.mxu0 0.0
  %771 = vmatprep.subr.mxu0 0.0
  %772 = vmatpush1.msra.mxu0 0.0
  %773 = vmatprep.subr.mxu0 0.0
  %774 = vmatpush1.msra.mxu0 0.0
  %775 = vmatprep.subr.mxu0 0.0
  %776 = vmatpush1.msra.mxu0 0.0
  %777 = vmatprep.subr.mxu0 0.0
  %778 = vmatpush1.msra.mxu0 0.0
  %779 = vmatprep.subr.mxu0 0.0
  %780 = vmatpush1.msra.mxu0 0.0
  %781 = vmatprep.subr.mxu0 0.0
  %782 = vmatpush1.msra.mxu0 0.0
  %783 = vmatprep.subr.mxu0 0.0
  %784 = vmatpush1.msra.mxu0 0.0
  %785 = vmatprep.subr.mxu0 0.0
  %786 = vmatpush1.msra.mxu0 0.0
  %787 = vmatprep.subr.mxu0 0.0
  %788 = vmatpush1.msra.mxu0 0.0
  %789 = vmatprep.subr.mxu0 0.0
  %790 = vmatpush1.msra.mxu0 0.0
  %791 = vmatprep.subr.mxu0 0.0
  %792 = vmatpush1.msra.mxu0 0.0
  %793 = vmatprep.subr.mxu0 0.0
  %794 = vmatpush1.msra.mxu0 0.0
  %795 = vmatprep.subr.mxu0 0.0
  %796 = vmatpush1.msra.mxu0 0.0
  %797 = vmatprep.subr.mxu0 0.0
  %798 = vmatpush1.msra.mxu0 0.0
  %799 = vmatprep.subr.mxu0 0.0
  %800 = vmatpush1.msra.mxu0 0.0
  %801 = vmatprep.subr.mxu0 0.0
  %802 = vmatpush1.msra.mxu0 0.0
  %803 = vmatprep.subr.mxu0 0.0
  %804 = vmatpush1.msra.mxu0 0.0
  %805 = vmatprep.subr.mxu0 0.0
  %806 = vmatpush1.msra.mxu0 0.0
  %807 = vmatprep.subr.mxu0 0.0
  %808 = vmatpush1.msra.mxu0 0.0
  %809 = vmatprep.subr.mxu0 0.0
  %810 = vmatpush1.msra.mxu0 0.0
  %811 = vmatprep.subr.mxu0 0.0
  %812 = vmatpush1.msra.mxu0 0.0
  %813 = vmatprep.subr.mxu0 0.0
  %814 = vmatpush1.msra.mxu0 0.0
  %815 = vmatprep.mubr.f32.mxu0 0.0
  %816 = vmatmul.mubr.f32.gmra.mrb[0].mxu0 %v749
  %v817 = vpop.f32.mrb[0].mxu0
  %v818 = vadd.f32 0.0, %v817
  %v819 = vpop.f32.mrb[0].mxu0
  %820 = vdwg.mxu0
  %v822 = vrot.slane %v818, 5
  %v824 = vadd.f32 %v257, %v822
  %v825 = vtanh.pop %v824
  %v827 = vrot.slane %v745, 5
  %828 = vrot.lane.b32.xlu0 %v827, 32
  %v829 = vpop.permute.xlu0 %828
  %v831 = vsel %vm186, %v825, %v829
  %v833 = vrot.slane %v831, 3
  %v834 = vsel %vm349, %v833, 0
  %836 = vmatprep.subr.mxu0 0.0
  %837 = vmatpush1.msra.mxu0 %v264
  %838 = vmatprep.subr.mxu0 0.0
  %839 = vmatpush1.msra.mxu0 %v265
  %840 = vmatprep.subr.mxu0 0.0
  %841 = vmatpush1.msra.mxu0 %v266
  %842 = vmatprep.subr.mxu0 0.0
  %843 = vmatpush1.msra.mxu0 %v267
  %844 = vmatprep.subr.mxu0 0.0
  %845 = vmatpush1.msra.mxu0 %v268
  %846 = vmatprep.subr.mxu0 0.0
  %847 = vmatpush1.msra.mxu0 %v269
  %848 = vmatprep.subr.mxu0 0.0
  %849 = vmatpush1.msra.mxu0 %v270
  %850 = vmatprep.subr.mxu0 0.0
  %851 = vmatpush1.msra.mxu0 %v271
  %852 = vmatprep.subr.mxu0 0.0
  %853 = vmatpush1.msra.mxu0 0.0
  %854 = vmatprep.subr.mxu0 0.0
  %855 = vmatpush1.msra.mxu0 0.0
  %856 = vmatprep.subr.mxu0 0.0
  %857 = vmatpush1.msra.mxu0 0.0
  %858 = vmatprep.subr.mxu0 0.0
  %859 = vmatpush1.msra.mxu0 0.0
  %860 = vmatprep.subr.mxu0 0.0
  %861 = vmatpush1.msra.mxu0 0.0
  %862 = vmatprep.subr.mxu0 0.0
  %863 = vmatpush1.msra.mxu0 0.0
  %864 = vmatprep.subr.mxu0 0.0
  %865 = vmatpush1.msra.mxu0 0.0
  %866 = vmatprep.subr.mxu0 0.0
  %867 = vmatpush1.msra.mxu0 0.0
  %868 = vmatprep.subr.mxu0 0.0
  %869 = vmatpush1.msra.mxu0 0.0
  %870 = vmatprep.subr.mxu0 0.0
  %871 = vmatpush1.msra.mxu0 0.0
  %872 = vmatprep.subr.mxu0 0.0
  %873 = vmatpush1.msra.mxu0 0.0
  %874 = vmatprep.subr.mxu0 0.0
  %875 = vmatpush1.msra.mxu0 0.0
  %876 = vmatprep.subr.mxu0 0.0
  %877 = vmatpush1.msra.mxu0 0.0
  %878 = vmatprep.subr.mxu0 0.0
  %879 = vmatpush1.msra.mxu0 0.0
  %880 = vmatprep.subr.mxu0 0.0
  %881 = vmatpush1.msra.mxu0 0.0
  %882 = vmatprep.subr.mxu0 0.0
  %883 = vmatpush1.msra.mxu0 0.0
  %884 = vmatprep.subr.mxu0 0.0
  %885 = vmatpush1.msra.mxu0 0.0
  %886 = vmatprep.subr.mxu0 0.0
  %887 = vmatpush1.msra.mxu0 0.0
  %888 = vmatprep.subr.mxu0 0.0
  %889 = vmatpush1.msra.mxu0 0.0
  %890 = vmatprep.subr.mxu0 0.0
  %891 = vmatpush1.msra.mxu0 0.0
  %892 = vmatprep.subr.mxu0 0.0
  %893 = vmatpush1.msra.mxu0 0.0
  %894 = vmatprep.subr.mxu0 0.0
  %895 = vmatpush1.msra.mxu0 0.0
  %896 = vmatprep.subr.mxu0 0.0
  %897 = vmatpush1.msra.mxu0 0.0
  %898 = vmatprep.subr.mxu0 0.0
  %899 = vmatpush1.msra.mxu0 0.0
  %900 = vmatprep.mubr.f32.mxu0 0.0
  %901 = vmatmul.mubr.f32.gmra.mrb[0].mxu0 %v834
  %v902 = vpop.f32.mrb[0].mxu0
  %v903 = vadd.f32 %v272, %v902
  %v904 = vpop.f32.mrb[0].mxu0
  %905 = vdwg.mxu0
  %v906 = vtanh.pop %v903
  %907 = vst.msk [vmem:[#allocation2 + $0x3] sm:$0x1] %vm424, %v906
  %v909 = vrot.slane %v825, 3
  %v910 = vsel %vm186, %v909, 0
  %912 = vmatprep.subr.mxu0 0.0
  %913 = vmatpush1.msra.mxu0 %v260
  %914 = vmatprep.subr.mxu0 0.0
  %915 = vmatpush1.msra.mxu0 %v261
  %916 = vmatprep.subr.mxu0 0.0
  %917 = vmatpush1.msra.mxu0 %v262
  %918 = vmatprep.subr.mxu0 0.0
  %919 = vmatpush1.msra.mxu0 %v263
  %920 = vmatprep.subr.mxu0 0.0
  %921 = vmatpush1.msra.mxu0 0.0
  %922 = vmatprep.subr.mxu0 0.0
  %923 = vmatpush1.msra.mxu0 0.0
  %924 = vmatprep.subr.mxu0 0.0
  %925 = vmatpush1.msra.mxu0 0.0
  %926 = vmatprep.subr.mxu0 0.0
  %927 = vmatpush1.msra.mxu0 0.0
  %928 = vmatprep.subr.mxu0 0.0
  %929 = vmatpush1.msra.mxu0 0.0
  %930 = vmatprep.subr.mxu0 0.0
  %931 = vmatpush1.msra.mxu0 0.0
  %932 = vmatprep.subr.mxu0 0.0
  %933 = vmatpush1.msra.mxu0 0.0
  %934 = vmatprep.subr.mxu0 0.0
  %935 = vmatpush1.msra.mxu0 0.0
  %936 = vmatprep.subr.mxu0 0.0
  %937 = vmatpush1.msra.mxu0 0.0
  %938 = vmatprep.subr.mxu0 0.0
  %939 = vmatpush1.msra.mxu0 0.0
  %940 = vmatprep.subr.mxu0 0.0
  %941 = vmatpush1.msra.mxu0 0.0
  %942 = vmatprep.subr.mxu0 0.0
  %943 = vmatpush1.msra.mxu0 0.0
  %944 = vmatprep.subr.mxu0 0.0
  %945 = vmatpush1.msra.mxu0 0.0
  %946 = vmatprep.subr.mxu0 0.0
  %947 = vmatpush1.msra.mxu0 0.0
  %948 = vmatprep.subr.mxu0 0.0
  %949 = vmatpush1.msra.mxu0 0.0
  %950 = vmatprep.subr.mxu0 0.0
  %951 = vmatpush1.msra.mxu0 0.0
  %952 = vmatprep.subr.mxu0 0.0
  %953 = vmatpush1.msra.mxu0 0.0
  %954 = vmatprep.subr.mxu0 0.0
  %955 = vmatpush1.msra.mxu0 0.0
  %956 = vmatprep.subr.mxu0 0.0
  %957 = vmatpush1.msra.mxu0 0.0
  %958 = vmatprep.subr.mxu0 0.0
  %959 = vmatpush1.msra.mxu0 0.0
  %960 = vmatprep.subr.mxu0 0.0
  %961 = vmatpush1.msra.mxu0 0.0
  %962 = vmatprep.subr.mxu0 0.0
  %963 = vmatpush1.msra.mxu0 0.0
  %964 = vmatprep.subr.mxu0 0.0
  %965 = vmatpush1.msra.mxu0 0.0
  %966 = vmatprep.subr.mxu0 0.0
  %967 = vmatpush1.msra.mxu0 0.0
  %968 = vmatprep.subr.mxu0 0.0
  %969 = vmatpush1.msra.mxu0 0.0
  %970 = vmatprep.subr.mxu0 0.0
  %971 = vmatpush1.msra.mxu0 0.0
  %972 = vmatprep.subr.mxu0 0.0
  %973 = vmatpush1.msra.mxu0 0.0
  %974 = vmatprep.subr.mxu0 0.0
  %975 = vmatpush1.msra.mxu0 0.0
  %976 = vmatprep.mubr.f32.mxu0 0.0
  %977 = vmatmul.mubr.f32.gmra.mrb[0].mxu0 %v910
  %v978 = vpop.f32.mrb[0].mxu0
  %v979 = vadd.f32 0.0, %v978
  %v980 = vpop.f32.mrb[0].mxu0
  %981 = vdwg.mxu0
  %v983 = vrot.slane %v979, 4
  %v985 = vadd.f32 %v257, %v983
  %v986 = vtanh.pop %v985
  %v988 = vrot.slane %v906, 4
  %989 = vrot.lane.b32.xlu0 %v988, 32
  %v990 = vpop.permute.xlu0 %989
  %v992 = vsel %vm186, %v986, %v990
  %v994 = vrot.slane %v992, 4
  %v995 = vsel %vm349, %v994, 0
  %997 = vmatprep.subr.mxu0 0.0
  %998 = vmatpush1.msra.mxu0 %v264
  %999 = vmatprep.subr.mxu0 0.0
  %1000 = vmatpush1.msra.mxu0 %v265
  %1001 = vmatprep.subr.mxu0 0.0
  %1002 = vmatpush1.msra.mxu0 %v266
  %1003 = vmatprep.subr.mxu0 0.0
  %1004 = vmatpush1.msra.mxu0 %v267
  %1005 = vmatprep.subr.mxu0 0.0
  %1006 = vmatpush1.msra.mxu0 %v268
  %1007 = vmatprep.subr.mxu0 0.0
  %1008 = vmatpush1.msra.mxu0 %v269
  %1009 = vmatprep.subr.mxu0 0.0
  %1010 = vmatpush1.msra.mxu0 %v270
  %1011 = vmatprep.subr.mxu0 0.0
  %1012 = vmatpush1.msra.mxu0 %v271
  %1013 = vmatprep.subr.mxu0 0.0
  %1014 = vmatpush1.msra.mxu0 0.0
  %1015 = vmatprep.subr.mxu0 0.0
  %1016 = vmatpush1.msra.mxu0 0.0
  %1017 = vmatprep.subr.mxu0 0.0
  %1018 = vmatpush1.msra.mxu0 0.0
  %1019 = vmatprep.subr.mxu0 0.0
  %1020 = vmatpush1.msra.mxu0 0.0
  %1021 = vmatprep.subr.mxu0 0.0
  %1022 = vmatpush1.msra.mxu0 0.0
  %1023 = vmatprep.subr.mxu0 0.0
  %1024 = vmatpush1.msra.mxu0 0.0
  %1025 = vmatprep.subr.mxu0 0.0
  %1026 = vmatpush1.msra.mxu0 0.0
  %1027 = vmatprep.subr.mxu0 0.0
  %1028 = vmatpush1.msra.mxu0 0.0
  %1029 = vmatprep.subr.mxu0 0.0
  %1030 = vmatpush1.msra.mxu0 0.0
  %1031 = vmatprep.subr.mxu0 0.0
  %1032 = vmatpush1.msra.mxu0 0.0
  %1033 = vmatprep.subr.mxu0 0.0
  %1034 = vmatpush1.msra.mxu0 0.0
  %1035 = vmatprep.subr.mxu0 0.0
  %1036 = vmatpush1.msra.mxu0 0.0
  %1037 = vmatprep.subr.mxu0 0.0
  %1038 = vmatpush1.msra.mxu0 0.0
  %1039 = vmatprep.subr.mxu0 0.0
  %1040 = vmatpush1.msra.mxu0 0.0
  %1041 = vmatprep.subr.mxu0 0.0
  %1042 = vmatpush1.msra.mxu0 0.0
  %1043 = vmatprep.subr.mxu0 0.0
  %1044 = vmatpush1.msra.mxu0 0.0
  %1045 = vmatprep.subr.mxu0 0.0
  %1046 = vmatpush1.msra.mxu0 0.0
  %1047 = vmatprep.subr.mxu0 0.0
  %1048 = vmatpush1.msra.mxu0 0.0
  %1049 = vmatprep.subr.mxu0 0.0
  %1050 = vmatpush1.msra.mxu0 0.0
  %1051 = vmatprep.subr.mxu0 0.0
  %1052 = vmatpush1.msra.mxu0 0.0
  %1053 = vmatprep.subr.mxu0 0.0
  %1054 = vmatpush1.msra.mxu0 0.0
  %1055 = vmatprep.subr.mxu0 0.0
  %1056 = vmatpush1.msra.mxu0 0.0
  %1057 = vmatprep.subr.mxu0 0.0
  %1058 = vmatpush1.msra.mxu0 0.0
  %1059 = vmatprep.subr.mxu0 0.0
  %1060 = vmatpush1.msra.mxu0 0.0
  %1061 = vmatprep.mubr.f32.mxu0 0.0
  %1062 = vmatmul.mubr.f32.gmra.mrb[0].mxu0 %v995
  %v1063 = vpop.f32.mrb[0].mxu0
  %v1064 = vadd.f32 %v272, %v1063
  %v1065 = vpop.f32.mrb[0].mxu0
  %1066 = vdwg.mxu0
  %v1067 = vtanh.pop %v1064
  %1068 = vst.msk [vmem:[#allocation2 + $0x4] sm:$0x1] %vm424, %v1067
  %v1070 = vrot.slane %v986, 4
  %v1071 = vsel %vm186, %v1070, 0
  %1073 = vmatprep.subr.mxu0 0.0
  %1074 = vmatpush1.msra.mxu0 %v260
  %1075 = vmatprep.subr.mxu0 0.0
  %1076 = vmatpush1.msra.mxu0 %v261
  %1077 = vmatprep.subr.mxu0 0.0
  %1078 = vmatpush1.msra.mxu0 %v262
  %1079 = vmatprep.subr.mxu0 0.0
  %1080 = vmatpush1.msra.mxu0 %v263
  %1081 = vmatprep.subr.mxu0 0.0
  %1082 = vmatpush1.msra.mxu0 0.0
  %1083 = vmatprep.subr.mxu0 0.0
  %1084 = vmatpush1.msra.mxu0 0.0
  %1085 = vmatprep.subr.mxu0 0.0
  %1086 = vmatpush1.msra.mxu0 0.0
  %1087 = vmatprep.subr.mxu0 0.0
  %1088 = vmatpush1.msra.mxu0 0.0
  %1089 = vmatprep.subr.mxu0 0.0
  %1090 = vmatpush1.msra.mxu0 0.0
  %1091 = vmatprep.subr.mxu0 0.0
  %1092 = vmatpush1.msra.mxu0 0.0
  %1093 = vmatprep.subr.mxu0 0.0
  %1094 = vmatpush1.msra.mxu0 0.0
  %1095 = vmatprep.subr.mxu0 0.0
  %1096 = vmatpush1.msra.mxu0 0.0
  %1097 = vmatprep.subr.mxu0 0.0
  %1098 = vmatpush1.msra.mxu0 0.0
  %1099 = vmatprep.subr.mxu0 0.0
  %1100 = vmatpush1.msra.mxu0 0.0
  %1101 = vmatprep.subr.mxu0 0.0
  %1102 = vmatpush1.msra.mxu0 0.0
  %1103 = vmatprep.subr.mxu0 0.0
  %1104 = vmatpush1.msra.mxu0 0.0
  %1105 = vmatprep.subr.mxu0 0.0
  %1106 = vmatpush1.msra.mxu0 0.0
  %1107 = vmatprep.subr.mxu0 0.0
  %1108 = vmatpush1.msra.mxu0 0.0
  %1109 = vmatprep.subr.mxu0 0.0
  %1110 = vmatpush1.msra.mxu0 0.0
  %1111 = vmatprep.subr.mxu0 0.0
  %1112 = vmatpush1.msra.mxu0 0.0
  %1113 = vmatprep.subr.mxu0 0.0
  %1114 = vmatpush1.msra.mxu0 0.0
  %1115 = vmatprep.subr.mxu0 0.0
  %1116 = vmatpush1.msra.mxu0 0.0
  %1117 = vmatprep.subr.mxu0 0.0
  %1118 = vmatpush1.msra.mxu0 0.0
  %1119 = vmatprep.subr.mxu0 0.0
  %1120 = vmatpush1.msra.mxu0 0.0
  %1121 = vmatprep.subr.mxu0 0.0
  %1122 = vmatpush1.msra.mxu0 0.0
  %1123 = vmatprep.subr.mxu0 0.0
  %1124 = vmatpush1.msra.mxu0 0.0
  %1125 = vmatprep.subr.mxu0 0.0
  %1126 = vmatpush1.msra.mxu0 0.0
  %1127 = vmatprep.subr.mxu0 0.0
  %1128 = vmatpush1.msra.mxu0 0.0
  %1129 = vmatprep.subr.mxu0 0.0
  %1130 = vmatpush1.msra.mxu0 0.0
  %1131 = vmatprep.subr.mxu0 0.0
  %1132 = vmatpush1.msra.mxu0 0.0
  %1133 = vmatprep.subr.mxu0 0.0
  %1134 = vmatpush1.msra.mxu0 0.0
  %1135 = vmatprep.subr.mxu0 0.0
  %1136 = vmatpush1.msra.mxu0 0.0
  %1137 = vmatprep.mubr.f32.mxu0 0.0
  %1138 = vmatmul.mubr.f32.gmra.mrb[0].mxu0 %v1071
  %v1139 = vpop.f32.mrb[0].mxu0
  %v1140 = vadd.f32 0.0, %v1139
  %v1141 = vpop.f32.mrb[0].mxu0
  %1142 = vdwg.mxu0
  %v1144 = vrot.slane %v1140, 3
  %v1146 = vadd.f32 %v257, %v1144
  %v1147 = vtanh.pop %v1146
  %v1149 = vrot.slane %v1067, 3
  %1150 = vrot.lane.b32.xlu0 %v1149, 32
  %v1151 = vpop.permute.xlu0 %1150
  %v1153 = vsel %vm186, %v1147, %v1151
  %v1155 = vrot.slane %v1153, 5
  %v1156 = vsel %vm349, %v1155, 0
  %1158 = vmatprep.subr.mxu0 0.0
  %1159 = vmatpush1.msra.mxu0 %v264
  %1160 = vmatprep.subr.mxu0 0.0
  %1161 = vmatpush1.msra.mxu0 %v265
  %1162 = vmatprep.subr.mxu0 0.0
  %1163 = vmatpush1.msra.mxu0 %v266
  %1164 = vmatprep.subr.mxu0 0.0
  %1165 = vmatpush1.msra.mxu0 %v267
  %1166 = vmatprep.subr.mxu0 0.0
  %1167 = vmatpush1.msra.mxu0 %v268
  %1168 = vmatprep.subr.mxu0 0.0
  %1169 = vmatpush1.msra.mxu0 %v269
  %1170 = vmatprep.subr.mxu0 0.0
  %1171 = vmatpush1.msra.mxu0 %v270
  %1172 = vmatprep.subr.mxu0 0.0
  %1173 = vmatpush1.msra.mxu0 %v271
  %1174 = vmatprep.subr.mxu0 0.0
  %1175 = vmatpush1.msra.mxu0 0.0
  %1176 = vmatprep.subr.mxu0 0.0
  %1177 = vmatpush1.msra.mxu0 0.0
  %1178 = vmatprep.subr.mxu0 0.0
  %1179 = vmatpush1.msra.mxu0 0.0
  %1180 = vmatprep.subr.mxu0 0.0
  %1181 = vmatpush1.msra.mxu0 0.0
  %1182 = vmatprep.subr.mxu0 0.0
  %1183 = vmatpush1.msra.mxu0 0.0
  %1184 = vmatprep.subr.mxu0 0.0
  %1185 = vmatpush1.msra.mxu0 0.0
  %1186 = vmatprep.subr.mxu0 0.0
  %1187 = vmatpush1.msra.mxu0 0.0
  %1188 = vmatprep.subr.mxu0 0.0
  %1189 = vmatpush1.msra.mxu0 0.0
  %1190 = vmatprep.subr.mxu0 0.0
  %1191 = vmatpush1.msra.mxu0 0.0
  %1192 = vmatprep.subr.mxu0 0.0
  %1193 = vmatpush1.msra.mxu0 0.0
  %1194 = vmatprep.subr.mxu0 0.0
  %1195 = vmatpush1.msra.mxu0 0.0
  %1196 = vmatprep.subr.mxu0 0.0
  %1197 = vmatpush1.msra.mxu0 0.0
  %1198 = vmatprep.subr.mxu0 0.0
  %1199 = vmatpush1.msra.mxu0 0.0
  %1200 = vmatprep.subr.mxu0 0.0
  %1201 = vmatpush1.msra.mxu0 0.0
  %1202 = vmatprep.subr.mxu0 0.0
  %1203 = vmatpush1.msra.mxu0 0.0
  %1204 = vmatprep.subr.mxu0 0.0
  %1205 = vmatpush1.msra.mxu0 0.0
  %1206 = vmatprep.subr.mxu0 0.0
  %1207 = vmatpush1.msra.mxu0 0.0
  %1208 = vmatprep.subr.mxu0 0.0
  %1209 = vmatpush1.msra.mxu0 0.0
  %1210 = vmatprep.subr.mxu0 0.0
  %1211 = vmatpush1.msra.mxu0 0.0
  %1212 = vmatprep.subr.mxu0 0.0
  %1213 = vmatpush1.msra.mxu0 0.0
  %1214 = vmatprep.subr.mxu0 0.0
  %1215 = vmatpush1.msra.mxu0 0.0
  %1216 = vmatprep.subr.mxu0 0.0
  %1217 = vmatpush1.msra.mxu0 0.0
  %1218 = vmatprep.subr.mxu0 0.0
  %1219 = vmatpush1.msra.mxu0 0.0
  %1220 = vmatprep.subr.mxu0 0.0
  %1221 = vmatpush1.msra.mxu0 0.0
  %1222 = vmatprep.mubr.f32.mxu0 0.0
  %1223 = vmatmul.mubr.f32.gmra.mrb[0].mxu0 %v1156
  %v1224 = vpop.f32.mrb[0].mxu0
  %v1225 = vadd.f32 %v272, %v1224
  %v1226 = vpop.f32.mrb[0].mxu0
  %1227 = vdwg.mxu0
  %v1228 = vtanh.pop %v1225
  %1229 = vst.msk [vmem:[#allocation2 + $0x5] sm:$0x1] %vm424, %v1228
  %v1231 = vrot.slane %v1147, 5
  %v1232 = vsel %vm186, %v1231, 0
  %1234 = vmatprep.subr.mxu0 0.0
  %1235 = vmatpush1.msra.mxu0 %v260
  %1236 = vmatprep.subr.mxu0 0.0
  %1237 = vmatpush1.msra.mxu0 %v261
  %1238 = vmatprep.subr.mxu0 0.0
  %1239 = vmatpush1.msra.mxu0 %v262
  %1240 = vmatprep.subr.mxu0 0.0
  %1241 = vmatpush1.msra.mxu0 %v263
  %1242 = vmatprep.subr.mxu0 0.0
  %1243 = vmatpush1.msra.mxu0 0.0
  %1244 = vmatprep.subr.mxu0 0.0
  %1245 = vmatpush1.msra.mxu0 0.0
  %1246 = vmatprep.subr.mxu0 0.0
  %1247 = vmatpush1.msra.mxu0 0.0
  %1248 = vmatprep.subr.mxu0 0.0
  %1249 = vmatpush1.msra.mxu0 0.0
  %1250 = vmatprep.subr.mxu0 0.0
  %1251 = vmatpush1.msra.mxu0 0.0
  %1252 = vmatprep.subr.mxu0 0.0
  %1253 = vmatpush1.msra.mxu0 0.0
  %1254 = vmatprep.subr.mxu0 0.0
  %1255 = vmatpush1.msra.mxu0 0.0
  %1256 = vmatprep.subr.mxu0 0.0
  %1257 = vmatpush1.msra.mxu0 0.0
  %1258 = vmatprep.subr.mxu0 0.0
  %1259 = vmatpush1.msra.mxu0 0.0
  %1260 = vmatprep.subr.mxu0 0.0
  %1261 = vmatpush1.msra.mxu0 0.0
  %1262 = vmatprep.subr.mxu0 0.0
  %1263 = vmatpush1.msra.mxu0 0.0
  %1264 = vmatprep.subr.mxu0 0.0
  %1265 = vmatpush1.msra.mxu0 0.0
  %1266 = vmatprep.subr.mxu0 0.0
  %1267 = vmatpush1.msra.mxu0 0.0
  %1268 = vmatprep.subr.mxu0 0.0
  %1269 = vmatpush1.msra.mxu0 0.0
  %1270 = vmatprep.subr.mxu0 0.0
  %1271 = vmatpush1.msra.mxu0 0.0
  %1272 = vmatprep.subr.mxu0 0.0
  %1273 = vmatpush1.msra.mxu0 0.0
  %1274 = vmatprep.subr.mxu0 0.0
  %1275 = vmatpush1.msra.mxu0 0.0
  %1276 = vmatprep.subr.mxu0 0.0
  %1277 = vmatpush1.msra.mxu0 0.0
  %1278 = vmatprep.subr.mxu0 0.0
  %1279 = vmatpush1.msra.mxu0 0.0
  %1280 = vmatprep.subr.mxu0 0.0
  %1281 = vmatpush1.msra.mxu0 0.0
  %1282 = vmatprep.subr.mxu0 0.0
  %1283 = vmatpush1.msra.mxu0 0.0
  %1284 = vmatprep.subr.mxu0 0.0
  %1285 = vmatpush1.msra.mxu0 0.0
  %1286 = vmatprep.subr.mxu0 0.0
  %1287 = vmatpush1.msra.mxu0 0.0
  %1288 = vmatprep.subr.mxu0 0.0
  %1289 = vmatpush1.msra.mxu0 0.0
  %1290 = vmatprep.subr.mxu0 0.0
  %1291 = vmatpush1.msra.mxu0 0.0
  %1292 = vmatprep.subr.mxu0 0.0
  %1293 = vmatpush1.msra.mxu0 0.0
  %1294 = vmatprep.subr.mxu0 0.0
  %1295 = vmatpush1.msra.mxu0 0.0
  %1296 = vmatprep.subr.mxu0 0.0
  %1297 = vmatpush1.msra.mxu0 0.0
  %1298 = vmatprep.mubr.f32.mxu0 0.0
  %1299 = vmatmul.mubr.f32.gmra.mrb[0].mxu0 %v1232
  %v1300 = vpop.f32.mrb[0].mxu0
  %v1301 = vadd.f32 0.0, %v1300
  %v1302 = vpop.f32.mrb[0].mxu0
  %1303 = vdwg.mxu0
  %v1305 = vrot.slane %v1301, 2
  %v1307 = vadd.f32 %v257, %v1305
  %v1308 = vtanh.pop %v1307
  %v1310 = vrot.slane %v1228, 2
  %1311 = vrot.lane.b32.xlu0 %v1310, 32
  %v1312 = vpop.permute.xlu0 %1311
  %v1314 = vsel %vm186, %v1308, %v1312
  %v1316 = vrot.slane %v1314, 6
  %v1317 = vsel %vm349, %v1316, 0
  %1319 = vmatprep.subr.mxu0 0.0
  %1320 = vmatpush1.msra.mxu0 %v264
  %1321 = vmatprep.subr.mxu0 0.0
  %1322 = vmatpush1.msra.mxu0 %v265
  %1323 = vmatprep.subr.mxu0 0.0
  %1324 = vmatpush1.msra.mxu0 %v266
  %1325 = vmatprep.subr.mxu0 0.0
  %1326 = vmatpush1.msra.mxu0 %v267
  %1327 = vmatprep.subr.mxu0 0.0
  %1328 = vmatpush1.msra.mxu0 %v268
  %1329 = vmatprep.subr.mxu0 0.0
  %1330 = vmatpush1.msra.mxu0 %v269
  %1331 = vmatprep.subr.mxu0 0.0
  %1332 = vmatpush1.msra.mxu0 %v270
  %1333 = vmatprep.subr.mxu0 0.0
  %1334 = vmatpush1.msra.mxu0 %v271
  %1335 = vmatprep.subr.mxu0 0.0
  %1336 = vmatpush1.msra.mxu0 0.0
  %1337 = vmatprep.subr.mxu0 0.0
  %1338 = vmatpush1.msra.mxu0 0.0
  %1339 = vmatprep.subr.mxu0 0.0
  %1340 = vmatpush1.msra.mxu0 0.0
  %1341 = vmatprep.subr.mxu0 0.0
  %1342 = vmatpush1.msra.mxu0 0.0
  %1343 = vmatprep.subr.mxu0 0.0
  %1344 = vmatpush1.msra.mxu0 0.0
  %1345 = vmatprep.subr.mxu0 0.0
  %1346 = vmatpush1.msra.mxu0 0.0
  %1347 = vmatprep.subr.mxu0 0.0
  %1348 = vmatpush1.msra.mxu0 0.0
  %1349 = vmatprep.subr.mxu0 0.0
  %1350 = vmatpush1.msra.mxu0 0.0
  %1351 = vmatprep.subr.mxu0 0.0
  %1352 = vmatpush1.msra.mxu0 0.0
  %1353 = vmatprep.subr.mxu0 0.0
  %1354 = vmatpush1.msra.mxu0 0.0
  %1355 = vmatprep.subr.mxu0 0.0
  %1356 = vmatpush1.msra.mxu0 0.0
  %1357 = vmatprep.subr.mxu0 0.0
  %1358 = vmatpush1.msra.mxu0 0.0
  %1359 = vmatprep.subr.mxu0 0.0
  %1360 = vmatpush1.msra.mxu0 0.0
  %1361 = vmatprep.subr.mxu0 0.0
  %1362 = vmatpush1.msra.mxu0 0.0
  %1363 = vmatprep.subr.mxu0 0.0
  %1364 = vmatpush1.msra.mxu0 0.0
  %1365 = vmatprep.subr.mxu0 0.0
  %1366 = vmatpush1.msra.mxu0 0.0
  %1367 = vmatprep.subr.mxu0 0.0
  %1368 = vmatpush1.msra.mxu0 0.0
  %1369 = vmatprep.subr.mxu0 0.0
  %1370 = vmatpush1.msra.mxu0 0.0
  %1371 = vmatprep.subr.mxu0 0.0
  %1372 = vmatpush1.msra.mxu0 0.0
  %1373 = vmatprep.subr.mxu0 0.0
  %1374 = vmatpush1.msra.mxu0 0.0
  %1375 = vmatprep.subr.mxu0 0.0
  %1376 = vmatpush1.msra.mxu0 0.0
  %1377 = vmatprep.subr.mxu0 0.0
  %1378 = vmatpush1.msra.mxu0 0.0
  %1379 = vmatprep.subr.mxu0 0.0
  %1380 = vmatpush1.msra.mxu0 0.0
  %1381 = vmatprep.subr.mxu0 0.0
  %1382 = vmatpush1.msra.mxu0 0.0
  %1383 = vmatprep.mubr.f32.mxu0 0.0
  %1384 = vmatmul.mubr.f32.gmra.mrb[0].mxu0 %v1317
  %v1385 = vpop.f32.mrb[0].mxu0
  %v1386 = vadd.f32 %v272, %v1385
  %v1387 = vpop.f32.mrb[0].mxu0
  %1388 = vdwg.mxu0
  %v1389 = vtanh.pop %v1386
  %1390 = vst.msk [vmem:[#allocation2 + $0x6] sm:$0x1] %vm424, %v1389
  %v1392 = vrot.slane %v1308, 6
  %v1393 = vsel %vm186, %v1392, 0
  %1395 = vmatprep.subr.mxu0 0.0
  %1396 = vmatpush1.msra.mxu0 %v260
  %1397 = vmatprep.subr.mxu0 0.0
  %1398 = vmatpush1.msra.mxu0 %v261
  %1399 = vmatprep.subr.mxu0 0.0
  %1400 = vmatpush1.msra.mxu0 %v262
  %1401 = vmatprep.subr.mxu0 0.0
  %1402 = vmatpush1.msra.mxu0 %v263
  %1403 = vmatprep.subr.mxu0 0.0
  %1404 = vmatpush1.msra.mxu0 0.0
  %1405 = vmatprep.subr.mxu0 0.0
  %1406 = vmatpush1.msra.mxu0 0.0
  %1407 = vmatprep.subr.mxu0 0.0
  %1408 = vmatpush1.msra.mxu0 0.0
  %1409 = vmatprep.subr.mxu0 0.0
  %1410 = vmatpush1.msra.mxu0 0.0
  %1411 = vmatprep.subr.mxu0 0.0
  %1412 = vmatpush1.msra.mxu0 0.0
  %1413 = vmatprep.subr.mxu0 0.0
  %1414 = vmatpush1.msra.mxu0 0.0
  %1415 = vmatprep.subr.mxu0 0.0
  %1416 = vmatpush1.msra.mxu0 0.0
  %1417 = vmatprep.subr.mxu0 0.0
  %1418 = vmatpush1.msra.mxu0 0.0
  %1419 = vmatprep.subr.mxu0 0.0
  %1420 = vmatpush1.msra.mxu0 0.0
  %1421 = vmatprep.subr.mxu0 0.0
  %1422 = vmatpush1.msra.mxu0 0.0
  %1423 = vmatprep.subr.mxu0 0.0
  %1424 = vmatpush1.msra.mxu0 0.0
  %1425 = vmatprep.subr.mxu0 0.0
  %1426 = vmatpush1.msra.mxu0 0.0
  %1427 = vmatprep.subr.mxu0 0.0
  %1428 = vmatpush1.msra.mxu0 0.0
  %1429 = vmatprep.subr.mxu0 0.0
  %1430 = vmatpush1.msra.mxu0 0.0
  %1431 = vmatprep.subr.mxu0 0.0
  %1432 = vmatpush1.msra.mxu0 0.0
  %1433 = vmatprep.subr.mxu0 0.0
  %1434 = vmatpush1.msra.mxu0 0.0
  %1435 = vmatprep.subr.mxu0 0.0
  %1436 = vmatpush1.msra.mxu0 0.0
  %1437 = vmatprep.subr.mxu0 0.0
  %1438 = vmatpush1.msra.mxu0 0.0
  %1439 = vmatprep.subr.mxu0 0.0
  %1440 = vmatpush1.msra.mxu0 0.0
  %1441 = vmatprep.subr.mxu0 0.0
  %1442 = vmatpush1.msra.mxu0 0.0
  %1443 = vmatprep.subr.mxu0 0.0
  %1444 = vmatpush1.msra.mxu0 0.0
  %1445 = vmatprep.subr.mxu0 0.0
  %1446 = vmatpush1.msra.mxu0 0.0
  %1447 = vmatprep.subr.mxu0 0.0
  %1448 = vmatpush1.msra.mxu0 0.0
  %1449 = vmatprep.subr.mxu0 0.0
  %1450 = vmatpush1.msra.mxu0 0.0
  %1451 = vmatprep.subr.mxu0 0.0
  %1452 = vmatpush1.msra.mxu0 0.0
  %1453 = vmatprep.subr.mxu0 0.0
  %1454 = vmatpush1.msra.mxu0 0.0
  %1455 = vmatprep.subr.mxu0 0.0
  %1456 = vmatpush1.msra.mxu0 0.0
  %1457 = vmatprep.subr.mxu0 0.0
  %1458 = vmatpush1.msra.mxu0 0.0
  %1459 = vmatprep.mubr.f32.mxu0 0.0
  %1460 = vmatmul.mubr.f32.gmra.mrb[0].mxu0 %v1393
  %v1461 = vpop.f32.mrb[0].mxu0
  %v1462 = vadd.f32 0.0, %v1461
  %v1463 = vpop.f32.mrb[0].mxu0
  %1464 = vdwg.mxu0
  %v1466 = vrot.slane %v1462, 1
  %v1468 = vadd.f32 %v257, %v1466
  %v1469 = vtanh.pop %v1468
  %v1471 = vrot.slane %v1389, 1
  %1472 = vrot.lane.b32.xlu0 %v1471, 32
  %v1473 = vpop.permute.xlu0 %1472
  %v1475 = vsel %vm186, %v1469, %v1473
  %v1477 = vrot.slane %v1475, 7
  %v1478 = vsel %vm349, %v1477, 0
  %1480 = vmatprep.subr.mxu0 0.0
  %1481 = vmatpush1.msra.mxu0 %v264
  %1482 = vmatprep.subr.mxu0 0.0
  %1483 = vmatpush1.msra.mxu0 %v265
  %1484 = vmatprep.subr.mxu0 0.0
  %1485 = vmatpush1.msra.mxu0 %v266
  %1486 = vmatprep.subr.mxu0 0.0
  %1487 = vmatpush1.msra.mxu0 %v267
  %1488 = vmatprep.subr.mxu0 0.0
  %1489 = vmatpush1.msra.mxu0 %v268
  %1490 = vmatprep.subr.mxu0 0.0
  %1491 = vmatpush1.msra.mxu0 %v269
  %1492 = vmatprep.subr.mxu0 0.0
  %1493 = vmatpush1.msra.mxu0 %v270
  %1494 = vmatprep.subr.mxu0 0.0
  %1495 = vmatpush1.msra.mxu0 %v271
  %1496 = vmatprep.subr.mxu0 0.0
  %1497 = vmatpush1.msra.mxu0 0.0
  %1498 = vmatprep.subr.mxu0 0.0
  %1499 = vmatpush1.msra.mxu0 0.0
  %1500 = vmatprep.subr.mxu0 0.0
  %1501 = vmatpush1.msra.mxu0 0.0
  %1502 = vmatprep.subr.mxu0 0.0
  %1503 = vmatpush1.msra.mxu0 0.0
  %1504 = vmatprep.subr.mxu0 0.0
  %1505 = vmatpush1.msra.mxu0 0.0
  %1506 = vmatprep.subr.mxu0 0.0
  %1507 = vmatpush1.msra.mxu0 0.0
  %1508 = vmatprep.subr.mxu0 0.0
  %1509 = vmatpush1.msra.mxu0 0.0
  %1510 = vmatprep.subr.mxu0 0.0
  %1511 = vmatpush1.msra.mxu0 0.0
  %1512 = vmatprep.subr.mxu0 0.0
  %1513 = vmatpush1.msra.mxu0 0.0
  %1514 = vmatprep.subr.mxu0 0.0
  %1515 = vmatpush1.msra.mxu0 0.0
  %1516 = vmatprep.subr.mxu0 0.0
  %1517 = vmatpush1.msra.mxu0 0.0
  %1518 = vmatprep.subr.mxu0 0.0
  %1519 = vmatpush1.msra.mxu0 0.0
  %1520 = vmatprep.subr.mxu0 0.0
  %1521 = vmatpush1.msra.mxu0 0.0
  %1522 = vmatprep.subr.mxu0 0.0
  %1523 = vmatpush1.msra.mxu0 0.0
  %1524 = vmatprep.subr.mxu0 0.0
  %1525 = vmatpush1.msra.mxu0 0.0
  %1526 = vmatprep.subr.mxu0 0.0
  %1527 = vmatpush1.msra.mxu0 0.0
  %1528 = vmatprep.subr.mxu0 0.0
  %1529 = vmatpush1.msra.mxu0 0.0
  %1530 = vmatprep.subr.mxu0 0.0
  %1531 = vmatpush1.msra.mxu0 0.0
  %1532 = vmatprep.subr.mxu0 0.0
  %1533 = vmatpush1.msra.mxu0 0.0
  %1534 = vmatprep.subr.mxu0 0.0
  %1535 = vmatpush1.msra.mxu0 0.0
  %1536 = vmatprep.subr.mxu0 0.0
  %1537 = vmatpush1.msra.mxu0 0.0
  %1538 = vmatprep.subr.mxu0 0.0
  %1539 = vmatpush1.msra.mxu0 0.0
  %1540 = vmatprep.subr.mxu0 0.0
  %1541 = vmatpush1.msra.mxu0 0.0
  %1542 = vmatprep.subr.mxu0 0.0
  %1543 = vmatpush1.msra.mxu0 0.0
  %1544 = vmatprep.mubr.f32.mxu0 0.0
  %1545 = vmatmul.mubr.f32.gmra.mrb[0].mxu0 %v1478
  %v1546 = vpop.f32.mrb[0].mxu0
  %v1547 = vadd.f32 %v272, %v1546
  %v1548 = vpop.f32.mrb[0].mxu0
  %1549 = vdwg.mxu0
  %v1550 = vtanh.pop %v1547
  %1551 = vst.msk [vmem:[#allocation2 + $0x7] sm:$0x1] %vm424, %v1550
  %v1552 = vld [vmem:[#allocation2] sm:$0xff]
  %v1553 = vld [vmem:[%s7] sm:$0xff]
  %v1554 = vld [vmem:[%s7 + $0x8] sm:$0xff]
  %v1555 = vld [vmem:[%s7 + $0x10] sm:$0xff]
  %v1556 = vld [vmem:[%s7 + $0x18] sm:$0xff]
  %v1557 = vld [vmem:[#allocation3] sm:$0x1]
  %v1559 = vlaneseq
  %v1560 = vshrl.u32 %v1559, 7
  %v1561 = vsub.s32 0, %v1560
  %v1562 = vrot.slane %v1557, %v1561
  %v1565 = vsel %vm186, %v1552, 0
  %1567 = vmatprep.subr.mxu0 0.0
  %1568 = vmatpush1.msra.mxu0 %v1553
  %1569 = vmatprep.subr.mxu0 0.0
  %1570 = vmatpush1.msra.mxu0 %v1554
  %1571 = vmatprep.subr.mxu0 0.0
  %1572 = vmatpush1.msra.mxu0 %v1555
  %1573 = vmatprep.subr.mxu0 0.0
  %1574 = vmatpush1.msra.mxu0 %v1556
  %1575 = vmatprep.subr.mxu0 0.0
  %1576 = vmatpush1.msra.mxu0 0.0
  %1577 = vmatprep.subr.mxu0 0.0
  %1578 = vmatpush1.msra.mxu0 0.0
  %1579 = vmatprep.subr.mxu0 0.0
  %1580 = vmatpush1.msra.mxu0 0.0
  %1581 = vmatprep.subr.mxu0 0.0
  %1582 = vmatpush1.msra.mxu0 0.0
  %1583 = vmatprep.subr.mxu0 0.0
  %1584 = vmatpush1.msra.mxu0 0.0
  %1585 = vmatprep.subr.mxu0 0.0
  %1586 = vmatpush1.msra.mxu0 0.0
  %1587 = vmatprep.subr.mxu0 0.0
  %1588 = vmatpush1.msra.mxu0 0.0
  %1589 = vmatprep.subr.mxu0 0.0
  %1590 = vmatpush1.msra.mxu0 0.0
  %1591 = vmatprep.subr.mxu0 0.0
  %1592 = vmatpush1.msra.mxu0 0.0
  %1593 = vmatprep.subr.mxu0 0.0
  %1594 = vmatpush1.msra.mxu0 0.0
  %1595 = vmatprep.subr.mxu0 0.0
  %1596 = vmatpush1.msra.mxu0 0.0
  %1597 = vmatprep.subr.mxu0 0.0
  %1598 = vmatpush1.msra.mxu0 0.0
  %1599 = vmatprep.subr.mxu0 0.0
  %1600 = vmatpush1.msra.mxu0 0.0
  %1601 = vmatprep.subr.mxu0 0.0
  %1602 = vmatpush1.msra.mxu0 0.0
  %1603 = vmatprep.subr.mxu0 0.0
  %1604 = vmatpush1.msra.mxu0 0.0
  %1605 = vmatprep.subr.mxu0 0.0
  %1606 = vmatpush1.msra.mxu0 0.0
  %1607 = vmatprep.subr.mxu0 0.0
  %1608 = vmatpush1.msra.mxu0 0.0
  %1609 = vmatprep.subr.mxu0 0.0
  %1610 = vmatpush1.msra.mxu0 0.0
  %1611 = vmatprep.subr.mxu0 0.0
  %1612 = vmatpush1.msra.mxu0 0.0
  %1613 = vmatprep.subr.mxu0 0.0
  %1614 = vmatpush1.msra.mxu0 0.0
  %1615 = vmatprep.subr.mxu0 0.0
  %1616 = vmatpush1.msra.mxu0 0.0
  %1617 = vmatprep.subr.mxu0 0.0
  %1618 = vmatpush1.msra.mxu0 0.0
  %1619 = vmatprep.subr.mxu0 0.0
  %1620 = vmatpush1.msra.mxu0 0.0
  %1621 = vmatprep.subr.mxu0 0.0
  %1622 = vmatpush1.msra.mxu0 0.0
  %1623 = vmatprep.subr.mxu0 0.0
  %1624 = vmatpush1.msra.mxu0 0.0
  %1625 = vmatprep.subr.mxu0 0.0
  %1626 = vmatpush1.msra.mxu0 0.0
  %1627 = vmatprep.subr.mxu0 0.0
  %1628 = vmatpush1.msra.mxu0 0.0
  %1629 = vmatprep.subr.mxu0 0.0
  %1630 = vmatpush1.msra.mxu0 0.0
  %1631 = vmatprep.mubr.f32.mxu0 0.0
  %1632 = vmatmul.mubr.f32.gmra.mrb[0].mxu0 %v1565
  %v1633 = vpop.f32.mrb[0].mxu0
  %v1634 = vadd.f32 %v1562, %v1633
  %v1635 = vpop.f32.mrb[0].mxu0
  %1636 = vdwg.mxu0
  %v1637 = vxor.u32 %v1634, 2147483648
  %v1638 = vmul.f32 %v1637, 1.442695
  %v1639 = vpow.pop %v1638
  %v1640 = vadd.f32 %v1639, 1.0
  %v1641 = vrcp.pop %v1640
  %v1642 = vmul.f32 1.0, %v1641
  %vm1643 = vcmask 7168
  %1644 = vst.msk [vmem:[%s9] sm:$0xff] %vm1643, %v1642
  // Predicated region
  $region38: #{tpu_custom_call.1} parent=0 // pred_check
    _
  $region39: #{tpu_custom_call.1} parent=0 // pred_check_branch
    %1646 = sbr.rel (0) target = $region41
  $region40: #{tpu_custom_call.1} parent=0 // pred_region
    _
  $region41: #{tpu_custom_call.1} parent=0 // pred_fallthru
    _
  // Predicated region
  $region42: #{tpu_custom_call.1} parent=0 // pred_check
    _
  $region43: #{tpu_custom_call.1} parent=0 // pred_check_branch
    %1648 = sbr.rel (0) target = $region45
  $region44: #{tpu_custom_call.1} parent=0 // pred_region
    _
  $region45: #{tpu_custom_call.1} parent=0 // pred_fallthru
    _

</llo_original>
